<compile_context>
chip_gen: v7x
topology: tpu7x:2x2x1
jax: 0.10.0
libtpu: 0.0.40
codegen_flags: <defaults>
</compile_context>

<pallas_src>
import jax
import jax.numpy as jnp
from jax.experimental import pallas as pl
from jax.experimental.pallas import tpu as pltpu


def _round_up(x, m):
    return ((x + m - 1) // m) * m


def _num_tensorcores_per_chip():
    """Best-effort detection of 2-TC chips (v7x). Falls back to 1."""
    try:
        kind = jax.devices()[0].device_kind.lower()
    except Exception:
        return 1
    return 2 if "v7" in kind else 1


def _auto_block_b(batch, num_tc, cap=4096):
    """Biggest tile that fits comfortably in VMEM (~12 MiB at cap=4096).

    Single grid step on 1-TC chips; even number of >=2 steps on 2-TC chips so
    both cores get work under dimension_semantics=("parallel",).
    """
    steps = max(1, pl.cdiv(batch, cap))
    if num_tc >= 2 and batch > 8:
        if steps < 2:
            steps = 2
        elif steps % 2 != 0:
            steps += 1
    return max(8, min(cap, _round_up(pl.cdiv(batch, steps), 8)))


def genexp_kernel(x_ref,
                  w_se_enc_ref, b_se_enc_ref,
                  w_se_dec_ref, b_se_dec_ref,
                  w1_ref, b1_ref,
                  w2_ref, b2_ref,
                  w3_ref, b3_ref,
                  logits_ref, amat_ref, wx_ref, z_ref):
    x = x_ref[...]                                  # (block_b, D), compute dtype
    cdt = x.dtype

    # --- squeeze-excite style feature attention: sigmoid(dec(tanh(enc(x)))) ---
    h = jnp.dot(x, w_se_enc_ref[...], preferred_element_type=jnp.float32)
    h = jnp.tanh(h + b_se_enc_ref[...])             # f32, (block_b, 20)
    # TODO(synk): nn.Dropout layers are identity (inference); training-mode masks not implemented.
    d = jnp.dot(h.astype(cdt), w_se_dec_ref[...],
                preferred_element_type=jnp.float32) + b_se_dec_ref[...]
    # Exact sigmoid via a single EUP tanh push + cheap VALU fma.
    amat = 0.5 * (jnp.tanh(0.5 * d) + 1.0)          # f32, (block_b, D)
    wx = x.astype(jnp.float32) * amat               # Weighted_x, f32

    # --- MLP trunk ---
    h1 = jnp.dot(wx.astype(cdt), w1_ref[...], preferred_element_type=jnp.float32)
    h1 = jnp.maximum(h1 + b1_ref[...], 0.0)         # relu1
    z = jnp.dot(h1.astype(cdt), w2_ref[...], preferred_element_type=jnp.float32)
    z = jnp.maximum(z + b2_ref[...], 0.0)           # relu2
    logits = jnp.dot(z.astype(cdt), w3_ref[...],
                     preferred_element_type=jnp.float32) + b3_ref[...]

    logits_ref[...] = logits.astype(logits_ref.dtype)
    amat_ref[...] = amat.astype(amat_ref.dtype)
    wx_ref[...] = wx.astype(wx_ref.dtype)
    z_ref[...] = z.astype(z_ref.dtype)


def prepare_params(params, compute_dtype=jnp.bfloat16):
    """Cast the five weight matrices to the MXU compute dtype once (biases stay f32)."""
    return tuple(p.astype(compute_dtype) if i % 2 == 0 else p
                 for i, p in enumerate(params))


def genexp_forward(x, params, *, block_b=None,
                   compute_dtype=jnp.bfloat16,
                   residual_dtype=jnp.bfloat16):
    B, D = x.shape
    (w_se_enc, b_se_enc, w_se_dec, b_se_dec, w1, b1, w2, b2, w3, b3) = params
    hid2 = w2.shape[1]           # 64
    n_class = w3.shape[1]

    if block_b is None:
        block_b = _auto_block_b(B, _num_tensorcores_per_chip())
    block_b = max(8, _round_up(block_b, 8))
    grid_b = pl.cdiv(B, block_b)          # tail block handled by Pallas masking

    def cast_w(w):                        # no-op if params were prepare_params()'d
        return w if w.dtype == compute_dtype else w.astype(compute_dtype)

    args = (x.astype(compute_dtype),
            cast_w(w_se_enc), b_se_enc,
            cast_w(w_se_dec), b_se_dec,
            cast_w(w1), b1,
            cast_w(w2), b2,
            cast_w(w3), b3)

    def row_spec(width):
        return pl.BlockSpec((block_b, width), lambda i: (i, 0))

    def resident_spec(shape):
        # Weights/biases: same block every step -> stay VMEM-resident.
        return pl.BlockSpec(shape, lambda i: (0, 0))

    in_specs = [row_spec(D)] + [resident_spec(a.shape) for a in args[1:]]
    out_specs = (
        row_spec(n_class),   # logits
        row_spec(D),         # Amat
        row_spec(D),         # Weighted_x
        row_spec(hid2),      # z
    )
    out_shape = (
        jax.ShapeDtypeStruct((B, n_class), jnp.float32),
        jax.ShapeDtypeStruct((B, D), residual_dtype),
        jax.ShapeDtypeStruct((B, D), residual_dtype),
        jax.ShapeDtypeStruct((B, hid2), residual_dtype),
    )

    logits, amat, wx, z = pl.pallas_call(
        genexp_kernel,
        grid_spec=pltpu.PrefetchScalarGridSpec(
            num_scalar_prefetch=0,
            grid=(grid_b,),
            in_specs=in_specs,
            out_specs=out_specs,
        ),
        out_shape=out_shape,
        compiler_params=pltpu.CompilerParams(
            dimension_semantics=("parallel",),
            vmem_limit_bytes=32 * 1024 * 1024,
        ),
    )(*args)
    return logits, amat, wx, z


def init_params(key, input_dim, n_class):
    """Deterministic init matching the PyTorch module's shapes.

    nn.Linear(in, out): weight (out, in) kaiming_normal_, bias uniform(+-1/sqrt(in)).
    Weights are stored pre-transposed as (in, out) for the kernel.
    """
    def linear(key, fan_in, fan_out):
        kw, kb = jax.random.split(key)
        std = jnp.sqrt(2.0 / fan_in)      # kaiming_normal_, fan_in mode, relu gain
        w = jax.random.normal(kw, (fan_in, fan_out), jnp.float32) * std
        bound = 1.0 / jnp.sqrt(fan_in)
        b = jax.random.uniform(kb, (1, fan_out), jnp.float32, -bound, bound)
        return w, b

    keys = jax.random.split(key, 5)
    w_se_enc, b_se_enc = linear(keys[0], input_dim, 20)
    w_se_dec, b_se_dec = linear(keys[1], 20, input_dim)
    w1, b1 = linear(keys[2], input_dim, 128)
    w2, b2 = linear(keys[3], 128, 64)
    w3, b3 = linear(keys[4], 64, n_class)
    return (w_se_enc, b_se_enc, w_se_dec, b_se_dec, w1, b1, w2, b2, w3, b3)


if __name__ == "__main__":
    input_dim = 32
    n_class = 4
    batch = 200   # deliberately NOT a multiple of 8 — exercises tail-block masking

    key = jax.random.PRNGKey(0)
    kx, kp = jax.random.split(key)
    x = jax.random.normal(kx, (batch, input_dim), jnp.float32)
    params = init_params(kp, input_dim, n_class)
    params_bf16 = prepare_params(params)          # cast weights once, outside the call

    logits, amat, weighted_x, z = genexp_forward(x, params_bf16)
    jax.block_until_ready((logits, amat, weighted_x, z))

    # Sanity check against a pure-f32 JAX reference.  Tolerances account for
    # bf16 MXU inputs and bf16 residual storage (the sigmoid itself is exact).
    (w_se_enc, b_se_enc, w_se_dec, b_se_dec, w1, b1, w2, b2, w3, b3) = params
    h = jnp.tanh(x @ w_se_enc + b_se_enc)
    amat_ref = jax.nn.sigmoid(h @ w_se_dec + b_se_dec)
    wx_ref = x * amat_ref
    h1 = jnp.maximum(wx_ref @ w1 + b1, 0.0)
    z_ref = jnp.maximum(h1 @ w2 + b2, 0.0)
    out_ref = z_ref @ w3 + b3

    def _check(name, got, want, tol):
        err = float(jnp.max(jnp.abs(got.astype(jnp.float32) - want)))
        assert err < tol, f"{name}: max abs err {err} >= {tol}"

    _check("amat", amat, amat_ref, 3e-2)
    _check("weighted_x", weighted_x, wx_ref, 1e-1)
    _check("z", z, z_ref, 2e-1)
    _check("logits", logits, out_ref, 2e-1)

    print("KERNEL_OK")
</pallas_src>

<mosaic_0001>
module attributes {stable_mosaic.version = 11 : i64} {
  func.func @genexp_kernel(%arg0: i32, %arg1: memref<200x32xbf16, #tpu.memory_space<vmem>>, %arg2: memref<32x20xbf16, #tpu.memory_space<vmem>>, %arg3: memref<1x20xf32, #tpu.memory_space<vmem>>, %arg4: memref<20x32xbf16, #tpu.memory_space<vmem>>, %arg5: memref<1x32xf32, #tpu.memory_space<vmem>>, %arg6: memref<32x128xbf16, #tpu.memory_space<vmem>>, %arg7: memref<1x128xf32, #tpu.memory_space<vmem>>, %arg8: memref<128x64xbf16, #tpu.memory_space<vmem>>, %arg9: memref<1x64xf32, #tpu.memory_space<vmem>>, %arg10: memref<64x4xbf16, #tpu.memory_space<vmem>>, %arg11: memref<1x4xf32, #tpu.memory_space<vmem>>, %arg12: memref<200x4xf32, #tpu.memory_space<vmem>>, %arg13: memref<200x32xbf16, #tpu.memory_space<vmem>>, %arg14: memref<200x32xbf16, #tpu.memory_space<vmem>>, %arg15: memref<200x64xbf16, #tpu.memory_space<vmem>>) attributes {dimension_semantics = [#tpu.dimension_semantics<parallel>], iteration_bounds = array<i64: 1>, scalar_prefetch = 0 : i64, scratch_operands = 0 : i64, tpu.core_type = #tpu.core_type<tc>, window_params = [{transform_indices = @transform_0, window_bounds = array<i64: 200, 32>}, {pipeline_mode = #tpu.pipeline_mode<synchronous>, transform_indices = @transform_1, window_bounds = array<i64: 32, 20>}, {pipeline_mode = #tpu.pipeline_mode<synchronous>, transform_indices = @transform_2, window_bounds = array<i64: 1, 20>}, {pipeline_mode = #tpu.pipeline_mode<synchronous>, transform_indices = @transform_3, window_bounds = array<i64: 20, 32>}, {pipeline_mode = #tpu.pipeline_mode<synchronous>, transform_indices = @transform_4, window_bounds = array<i64: 1, 32>}, {pipeline_mode = #tpu.pipeline_mode<synchronous>, transform_indices = @transform_5, window_bounds = array<i64: 32, 128>}, {pipeline_mode = #tpu.pipeline_mode<synchronous>, transform_indices = @transform_6, window_bounds = array<i64: 1, 128>}, {pipeline_mode = #tpu.pipeline_mode<synchronous>, transform_indices = @transform_7, window_bounds = array<i64: 128, 64>}, {pipeline_mode = #tpu.pipeline_mode<synchronous>, transform_indices = @transform_8, window_bounds = array<i64: 1, 64>}, {pipeline_mode = #tpu.pipeline_mode<synchronous>, transform_indices = @transform_9, window_bounds = array<i64: 64, 4>}, {pipeline_mode = #tpu.pipeline_mode<synchronous>, transform_indices = @transform_10, window_bounds = array<i64: 1, 4>}, {transform_indices = @transform_11, window_bounds = array<i64: 200, 4>}, {transform_indices = @transform_12, window_bounds = array<i64: 200, 32>}, {transform_indices = @transform_13, window_bounds = array<i64: 200, 32>}, {transform_indices = @transform_14, window_bounds = array<i64: 200, 64>}]} {
    %c0 = arith.constant 0 : index
    %c0_0 = arith.constant 0 : index
    %0 = vector.load %arg1[%c0, %c0_0] : memref<200x32xbf16, #tpu.memory_space<vmem>>, vector<200x32xbf16>
    %c0_1 = arith.constant 0 : index
    %c0_2 = arith.constant 0 : index
    %1 = vector.load %arg2[%c0_1, %c0_2] : memref<32x20xbf16, #tpu.memory_space<vmem>>, vector<32x20xbf16>
    %cst = arith.constant dense<0.000000e+00> : vector<200x20xf32>
    %2 = tpu.matmul %0, %1, %cst {dimension_numbers = #tpu.dot_dimension_numbers<[1], [0], [0], [1], [0, 0, 1, 1], [], []>} : vector<200x32xbf16>, vector<32x20xbf16>, vector<200x20xf32> -> vector<200x20xf32>
    %c0_3 = arith.constant 0 : index
    %c0_4 = arith.constant 0 : index
    %3 = vector.load %arg3[%c0_3, %c0_4] : memref<1x20xf32, #tpu.memory_space<vmem>>, vector<1x20xf32>
    %4 = vector.broadcast %3 : vector<1x20xf32> to vector<200x20xf32>
    %5 = arith.addf %2, %4 : vector<200x20xf32>
    %6 = math.tanh %5 : vector<200x20xf32>
    %7 = arith.truncf %6 : vector<200x20xf32> to vector<200x20xbf16>
    %c0_5 = arith.constant 0 : index
    %c0_6 = arith.constant 0 : index
    %8 = vector.load %arg4[%c0_5, %c0_6] : memref<20x32xbf16, #tpu.memory_space<vmem>>, vector<20x32xbf16>
    %cst_7 = arith.constant dense<0.000000e+00> : vector<200x32xf32>
    %9 = tpu.matmul %7, %8, %cst_7 {dimension_numbers = #tpu.dot_dimension_numbers<[1], [0], [0], [1], [0, 0, 1, 1], [], []>} : vector<200x20xbf16>, vector<20x32xbf16>, vector<200x32xf32> -> vector<200x32xf32>
    %c0_8 = arith.constant 0 : index
    %c0_9 = arith.constant 0 : index
    %10 = vector.load %arg5[%c0_8, %c0_9] : memref<1x32xf32, #tpu.memory_space<vmem>>, vector<1x32xf32>
    %11 = vector.broadcast %10 : vector<1x32xf32> to vector<200x32xf32>
    %12 = arith.addf %9, %11 : vector<200x32xf32>
    %cst_10 = arith.constant 5.000000e-01 : f32
    %13 = vector.broadcast %cst_10 : f32 to vector<200x32xf32>
    %14 = arith.mulf %13, %12 : vector<200x32xf32>
    %15 = math.tanh %14 : vector<200x32xf32>
    %cst_11 = arith.constant 1.000000e+00 : f32
    %16 = vector.broadcast %cst_11 : f32 to vector<200x32xf32>
    %17 = arith.addf %15, %16 : vector<200x32xf32>
    %cst_12 = arith.constant 5.000000e-01 : f32
    %18 = vector.broadcast %cst_12 : f32 to vector<200x32xf32>
    %19 = arith.mulf %18, %17 : vector<200x32xf32>
    %20 = arith.extf %0 : vector<200x32xbf16> to vector<200x32xf32>
    %21 = arith.mulf %20, %19 : vector<200x32xf32>
    %22 = arith.truncf %21 : vector<200x32xf32> to vector<200x32xbf16>
    %c0_13 = arith.constant 0 : index
    %c0_14 = arith.constant 0 : index
    %23 = vector.load %arg6[%c0_13, %c0_14] : memref<32x128xbf16, #tpu.memory_space<vmem>>, vector<32x128xbf16>
    %cst_15 = arith.constant dense<0.000000e+00> : vector<200x128xf32>
    %24 = tpu.matmul %22, %23, %cst_15 {dimension_numbers = #tpu.dot_dimension_numbers<[1], [0], [0], [1], [0, 0, 1, 1], [], []>} : vector<200x32xbf16>, vector<32x128xbf16>, vector<200x128xf32> -> vector<200x128xf32>
    %c0_16 = arith.constant 0 : index
    %c0_17 = arith.constant 0 : index
    %25 = vector.load %arg7[%c0_16, %c0_17] : memref<1x128xf32, #tpu.memory_space<vmem>>, vector<1x128xf32>
    %26 = vector.broadcast %25 : vector<1x128xf32> to vector<200x128xf32>
    %27 = arith.addf %24, %26 : vector<200x128xf32>
    %cst_18 = arith.constant 0.000000e+00 : f32
    %28 = vector.broadcast %cst_18 : f32 to vector<200x128xf32>
    %29 = arith.maximumf %27, %28 : vector<200x128xf32>
    %30 = arith.truncf %29 : vector<200x128xf32> to vector<200x128xbf16>
    %c0_19 = arith.constant 0 : index
    %c0_20 = arith.constant 0 : index
    %31 = vector.load %arg8[%c0_19, %c0_20] : memref<128x64xbf16, #tpu.memory_space<vmem>>, vector<128x64xbf16>
    %cst_21 = arith.constant dense<0.000000e+00> : vector<200x64xf32>
    %32 = tpu.matmul %30, %31, %cst_21 {dimension_numbers = #tpu.dot_dimension_numbers<[1], [0], [0], [1], [0, 0, 1, 1], [], []>} : vector<200x128xbf16>, vector<128x64xbf16>, vector<200x64xf32> -> vector<200x64xf32>
    %c0_22 = arith.constant 0 : index
    %c0_23 = arith.constant 0 : index
    %33 = vector.load %arg9[%c0_22, %c0_23] : memref<1x64xf32, #tpu.memory_space<vmem>>, vector<1x64xf32>
    %34 = vector.broadcast %33 : vector<1x64xf32> to vector<200x64xf32>
    %35 = arith.addf %32, %34 : vector<200x64xf32>
    %cst_24 = arith.constant 0.000000e+00 : f32
    %36 = vector.broadcast %cst_24 : f32 to vector<200x64xf32>
    %37 = arith.maximumf %35, %36 : vector<200x64xf32>
    %38 = arith.truncf %37 : vector<200x64xf32> to vector<200x64xbf16>
    %c0_25 = arith.constant 0 : index
    %c0_26 = arith.constant 0 : index
    %39 = vector.load %arg10[%c0_25, %c0_26] : memref<64x4xbf16, #tpu.memory_space<vmem>>, vector<64x4xbf16>
    %cst_27 = arith.constant dense<0.000000e+00> : vector<200x4xf32>
    %40 = tpu.matmul %38, %39, %cst_27 {dimension_numbers = #tpu.dot_dimension_numbers<[1], [0], [0], [1], [0, 0, 1, 1], [], []>} : vector<200x64xbf16>, vector<64x4xbf16>, vector<200x4xf32> -> vector<200x4xf32>
    %c0_28 = arith.constant 0 : index
    %c0_29 = arith.constant 0 : index
    %41 = vector.load %arg11[%c0_28, %c0_29] : memref<1x4xf32, #tpu.memory_space<vmem>>, vector<1x4xf32>
    %42 = vector.broadcast %41 : vector<1x4xf32> to vector<200x4xf32>
    %43 = arith.addf %40, %42 : vector<200x4xf32>
    %c0_30 = arith.constant 0 : index
    %c0_31 = arith.constant 0 : index
    %44 = vector.load %arg12[%c0_30, %c0_31] : memref<200x4xf32, #tpu.memory_space<vmem>>, vector<200x4xf32>
    tpu.vector_store %arg12[%c0_30, %c0_31], %43 {strides = array<i32>} : memref<200x4xf32, #tpu.memory_space<vmem>>, vector<200x4xf32>,
    %45 = arith.truncf %19 : vector<200x32xf32> to vector<200x32xbf16>
    %c0_32 = arith.constant 0 : index
    %c0_33 = arith.constant 0 : index
    %46 = vector.load %arg13[%c0_32, %c0_33] : memref<200x32xbf16, #tpu.memory_space<vmem>>, vector<200x32xbf16>
    tpu.vector_store %arg13[%c0_32, %c0_33], %45 {strides = array<i32>} : memref<200x32xbf16, #tpu.memory_space<vmem>>, vector<200x32xbf16>,
    %47 = arith.truncf %21 : vector<200x32xf32> to vector<200x32xbf16>
    %c0_34 = arith.constant 0 : index
    %c0_35 = arith.constant 0 : index
    %48 = vector.load %arg14[%c0_34, %c0_35] : memref<200x32xbf16, #tpu.memory_space<vmem>>, vector<200x32xbf16>
    tpu.vector_store %arg14[%c0_34, %c0_35], %47 {strides = array<i32>} : memref<200x32xbf16, #tpu.memory_space<vmem>>, vector<200x32xbf16>,
    %49 = arith.truncf %37 : vector<200x64xf32> to vector<200x64xbf16>
    %c0_36 = arith.constant 0 : index
    %c0_37 = arith.constant 0 : index
    %50 = vector.load %arg15[%c0_36, %c0_37] : memref<200x64xbf16, #tpu.memory_space<vmem>>, vector<200x64xbf16>
    tpu.vector_store %arg15[%c0_36, %c0_37], %49 {strides = array<i32>} : memref<200x64xbf16, #tpu.memory_space<vmem>>, vector<200x64xbf16>,
    return
  }
  func.func @transform_0(%arg0: i32) -> (i32, i32) {
    %c0_i32 = arith.constant 0 : i32
    %c0_i32_0 = arith.constant 0 : i32
    return %arg0, %c0_i32 : i32, i32
  }
  func.func @transform_1(%arg0: i32) -> (i32, i32) {
    %c0_i32 = arith.constant 0 : i32
    %c0_i32_0 = arith.constant 0 : i32
    %c0_i32_1 = arith.constant 0 : i32
    return %c0_i32, %c0_i32_0 : i32, i32
  }
  func.func @transform_2(%arg0: i32) -> (i32, i32) {
    %c0_i32 = arith.constant 0 : i32
    %c0_i32_0 = arith.constant 0 : i32
    %c0_i32_1 = arith.constant 0 : i32
    return %c0_i32, %c0_i32_0 : i32, i32
  }
  func.func @transform_3(%arg0: i32) -> (i32, i32) {
    %c0_i32 = arith.constant 0 : i32
    %c0_i32_0 = arith.constant 0 : i32
    %c0_i32_1 = arith.constant 0 : i32
    return %c0_i32, %c0_i32_0 : i32, i32
  }
  func.func @transform_4(%arg0: i32) -> (i32, i32) {
    %c0_i32 = arith.constant 0 : i32
    %c0_i32_0 = arith.constant 0 : i32
    %c0_i32_1 = arith.constant 0 : i32
    return %c0_i32, %c0_i32_0 : i32, i32
  }
  func.func @transform_5(%arg0: i32) -> (i32, i32) {
    %c0_i32 = arith.constant 0 : i32
    %c0_i32_0 = arith.constant 0 : i32
    %c0_i32_1 = arith.constant 0 : i32
    return %c0_i32, %c0_i32_0 : i32, i32
  }
  func.func @transform_6(%arg0: i32) -> (i32, i32) {
    %c0_i32 = arith.constant 0 : i32
    %c0_i32_0 = arith.constant 0 : i32
    %c0_i32_1 = arith.constant 0 : i32
    return %c0_i32, %c0_i32_0 : i32, i32
  }
  func.func @transform_7(%arg0: i32) -> (i32, i32) {
    %c0_i32 = arith.constant 0 : i32
    %c0_i32_0 = arith.constant 0 : i32
    %c0_i32_1 = arith.constant 0 : i32
    return %c0_i32, %c0_i32_0 : i32, i32
  }
  func.func @transform_8(%arg0: i32) -> (i32, i32) {
    %c0_i32 = arith.constant 0 : i32
    %c0_i32_0 = arith.constant 0 : i32
    %c0_i32_1 = arith.constant 0 : i32
    return %c0_i32, %c0_i32_0 : i32, i32
  }
  func.func @transform_9(%arg0: i32) -> (i32, i32) {
    %c0_i32 = arith.constant 0 : i32
    %c0_i32_0 = arith.constant 0 : i32
    %c0_i32_1 = arith.constant 0 : i32
    return %c0_i32, %c0_i32_0 : i32, i32
  }
  func.func @transform_10(%arg0: i32) -> (i32, i32) {
    %c0_i32 = arith.constant 0 : i32
    %c0_i32_0 = arith.constant 0 : i32
    %c0_i32_1 = arith.constant 0 : i32
    return %c0_i32, %c0_i32_0 : i32, i32
  }
  func.func @transform_11(%arg0: i32) -> (i32, i32) {
    %c0_i32 = arith.constant 0 : i32
    %c0_i32_0 = arith.constant 0 : i32
    return %arg0, %c0_i32 : i32, i32
  }
  func.func @transform_12(%arg0: i32) -> (i32, i32) {
    %c0_i32 = arith.constant 0 : i32
    %c0_i32_0 = arith.constant 0 : i32
    return %arg0, %c0_i32 : i32, i32
  }
  func.func @transform_13(%arg0: i32) -> (i32, i32) {
    %c0_i32 = arith.constant 0 : i32
    %c0_i32_0 = arith.constant 0 : i32
    return %arg0, %c0_i32 : i32, i32
  }
  func.func @transform_14(%arg0: i32) -> (i32, i32) {
    %c0_i32 = arith.constant 0 : i32
    %c0_i32_0 = arith.constant 0 : i32
    return %arg0, %c0_i32 : i32, i32
  }
}

</mosaic_0001>

<llo_original>
// kernel: tpu_custom_call.1
$region0: #{tpu_custom_call.1}
  #allocation0 [shape = 'u32[]', space=smem, size = 0x4, offset = 0x4, fixed_abs, tag = 'smem constant byte address 0x4 - core index']
  #allocation1 [shape = 'u32[144,128]{1,0:T(1,128)}', space=vmem, size = 0x12000, scoped, tag = 'internal scratch']
  %s0 = inlined_call_operand.vmem [shape: bf16[200,32], index: 0, kind: input, shape index: {}]
  %s1 = inlined_call_operand.vmem [shape: bf16[32,20], index: 1, kind: input, shape index: {}]
  %s2 = inlined_call_operand.vmem [shape: f32[1,20], index: 2, kind: input, shape index: {}]
  %s3 = inlined_call_operand.vmem [shape: bf16[20,32], index: 3, kind: input, shape index: {}]
  %s4 = inlined_call_operand.vmem [shape: f32[1,32], index: 4, kind: input, shape index: {}]
  %s5 = inlined_call_operand.vmem [shape: bf16[32,128], index: 5, kind: input, shape index: {}]
  %s6 = inlined_call_operand.vmem [shape: f32[1,128], index: 6, kind: input, shape index: {}]
  %s7 = inlined_call_operand.vmem [shape: bf16[128,64], index: 7, kind: input, shape index: {}]
  %s8 = inlined_call_operand.vmem [shape: f32[1,64], index: 8, kind: input, shape index: {}]
  %s9 = inlined_call_operand.vmem [shape: bf16[64,4], index: 9, kind: input, shape index: {}]
  %s10 = inlined_call_operand.vmem [shape: f32[1,4], index: 10, kind: input, shape index: {}]
  %s11 = inlined_call_operand.vmem [shape: f32[200,4], index: 11, kind: output, shape index: {0}]
  %s12 = inlined_call_operand.vmem [shape: bf16[200,32], index: 12, kind: output, shape index: {1}]
  %s13 = inlined_call_operand.vmem [shape: bf16[200,32], index: 13, kind: output, shape index: {2}]
  %s14 = inlined_call_operand.vmem [shape: bf16[200,64], index: 14, kind: output, shape index: {3}]
  %15 = xla_tuple %s11, %s12, %s13, %s14
  %s16 = sld [smem:[#allocation0]]
  $region78: #{tpu_custom_call.1} parent=0
    _
  %s18 = ssub.s32 1, %s16
  %s19 = scalar_select 0, %s18, %s16
  // Predicated region
  $region2: #{tpu_custom_call.1} parent=0 // pred_check
    _
  $region3: #{tpu_custom_call.1} parent=0 // pred_check_branch
    %21 = sbr.rel (0) target = $region5
  $region4: #{tpu_custom_call.1} parent=0 // pred_region
    _
  $region5: #{tpu_custom_call.1} parent=0 // pred_fallthru
    _
  // Predicated region
  $region6: #{tpu_custom_call.1} parent=0 // pred_check
    _
  $region7: #{tpu_custom_call.1} parent=0 // pred_check_branch
    %23 = sbr.rel (0) target = $region9
  $region8: #{tpu_custom_call.1} parent=0 // pred_region
    _
  $region9: #{tpu_custom_call.1} parent=0 // pred_fallthru
    _
  // Predicated region
  $region10: #{tpu_custom_call.1} parent=0 // pred_check
    _
  $region11: #{tpu_custom_call.1} parent=0 // pred_check_branch
    %25 = sbr.rel (0) target = $region13
  $region12: #{tpu_custom_call.1} parent=0 // pred_region
    _
  $region13: #{tpu_custom_call.1} parent=0 // pred_fallthru
    _
  // Predicated region
  $region14: #{tpu_custom_call.1} parent=0 // pred_check
    _
  $region15: #{tpu_custom_call.1} parent=0 // pred_check_branch
    %27 = sbr.rel (0) target = $region17
  $region16: #{tpu_custom_call.1} parent=0 // pred_region
    _
  $region17: #{tpu_custom_call.1} parent=0 // pred_fallthru
    _
  // Predicated region
  $region18: #{tpu_custom_call.1} parent=0 // pred_check
    _
  $region19: #{tpu_custom_call.1} parent=0 // pred_check_branch
    %29 = sbr.rel (0) target = $region21
  $region20: #{tpu_custom_call.1} parent=0 // pred_region
    _
  $region21: #{tpu_custom_call.1} parent=0 // pred_fallthru
    _
  // Predicated region
  $region22: #{tpu_custom_call.1} parent=0 // pred_check
    _
  $region23: #{tpu_custom_call.1} parent=0 // pred_check_branch
    %31 = sbr.rel (0) target = $region25
  $region24: #{tpu_custom_call.1} parent=0 // pred_region
    _
  $region25: #{tpu_custom_call.1} parent=0 // pred_fallthru
    _
  // Predicated region
  $region26: #{tpu_custom_call.1} parent=0 // pred_check
    _
  $region27: #{tpu_custom_call.1} parent=0 // pred_check_branch
    %33 = sbr.rel (0) target = $region29
  $region28: #{tpu_custom_call.1} parent=0 // pred_region
    _
  $region29: #{tpu_custom_call.1} parent=0 // pred_fallthru
    _
  // Predicated region
  $region30: #{tpu_custom_call.1} parent=0 // pred_check
    _
  $region31: #{tpu_custom_call.1} parent=0 // pred_check_branch
    %35 = sbr.rel (0) target = $region33
  $region32: #{tpu_custom_call.1} parent=0 // pred_region
    _
  $region33: #{tpu_custom_call.1} parent=0 // pred_fallthru
    _
  // Predicated region
  $region34: #{tpu_custom_call.1} parent=0 // pred_check
    _
  $region35: #{tpu_custom_call.1} parent=0 // pred_check_branch
    %37 = sbr.rel (0) target = $region37
  $region36: #{tpu_custom_call.1} parent=0 // pred_region
    _
  $region37: #{tpu_custom_call.1} parent=0 // pred_fallthru
    _
  // Predicated region
  $region38: #{tpu_custom_call.1} parent=0 // pred_check
    _
  $region39: #{tpu_custom_call.1} parent=0 // pred_check_branch
    %39 = sbr.rel (0) target = $region41
  $region40: #{tpu_custom_call.1} parent=0 // pred_region
    _
  $region41: #{tpu_custom_call.1} parent=0 // pred_fallthru
    _
  // Predicated region
  $region42: #{tpu_custom_call.1} parent=0 // pred_check
    _
  $region43: #{tpu_custom_call.1} parent=0 // pred_check_branch
    %41 = sbr.rel (0) target = $region45
  $region44: #{tpu_custom_call.1} parent=0 // pred_region
    _
  $region45: #{tpu_custom_call.1} parent=0 // pred_fallthru
    _
  %v43 = vld [vmem:[%s0] sm:$0xf]
  %v44 = vld [vmem:[%s0 + $0x4] sm:$0xf]
  %v45 = vld [vmem:[%s0 + $0x8] sm:$0xf]
  %v46 = vld [vmem:[%s0 + $0xc] sm:$0xf]
  %v47 = vld [vmem:[%s0 + $0x10] sm:$0xf]
  %v48 = vld [vmem:[%s0 + $0x14] sm:$0xf]
  %v49 = vld [vmem:[%s0 + $0x18] sm:$0xf]
  %v50 = vld [vmem:[%s0 + $0x1c] sm:$0xf]
  %v51 = vld [vmem:[%s0 + $0x20] sm:$0xf]
  %v52 = vld [vmem:[%s0 + $0x24] sm:$0xf]
  %v53 = vld [vmem:[%s0 + $0x28] sm:$0xf]
  %v54 = vld [vmem:[%s0 + $0x2c] sm:$0xf]
  %v55 = vld [vmem:[%s0 + $0x30] sm:$0xf]
  %v56 = vld [vmem:[%s0 + $0x34] sm:$0xf]
  %v57 = vld [vmem:[%s0 + $0x38] sm:$0xf]
  %v58 = vld [vmem:[%s0 + $0x3c] sm:$0xf]
  %v59 = vld [vmem:[%s0 + $0x40] sm:$0xf]
  %v60 = vld [vmem:[%s0 + $0x44] sm:$0xf]
  %v61 = vld [vmem:[%s0 + $0x48] sm:$0xf]
  %v62 = vld [vmem:[%s0 + $0x4c] sm:$0xf]
  %v63 = vld [vmem:[%s0 + $0x50] sm:$0xf]
  %v64 = vld [vmem:[%s0 + $0x54] sm:$0xf]
  %v65 = vld [vmem:[%s0 + $0x58] sm:$0xf]
  %v66 = vld [vmem:[%s0 + $0x5c] sm:$0xf]
  %v67 = vld [vmem:[%s0 + $0x60] sm:$0xf]
  %v68 = vld [vmem:[%s1] sm:$0xf]
  %v69 = vld [vmem:[%s1 + $0x4] sm:$0xf]
  %v70 = vld [vmem:[%s1 + $0x8] sm:$0xf]
  %v71 = vld [vmem:[%s1 + $0xc] sm:$0xf]
  %v72 = vld [vmem:[%s2] sm:$0x1]
  %v74 = vlaneseq
  %v75 = vshrl.u32 %v74, 7
  %v76 = vsub.s32 0, %v75
  %v77 = vrot.slane %v72, %v76
  %v104 = vunpack.c.l.b16 %v43
  %v105 = vunpack.c.l.b16 %v44
  %v106 = vunpack.c.l.b16 %v45
  %v107 = vunpack.c.l.b16 %v46
  %v108 = vunpack.c.l.b16 %v47
  %v109 = vunpack.c.l.b16 %v48
  %v110 = vunpack.c.l.b16 %v49
  %v111 = vunpack.c.l.b16 %v50
  %v112 = vunpack.c.l.b16 %v51
  %v113 = vunpack.c.l.b16 %v52
  %v114 = vunpack.c.l.b16 %v53
  %v115 = vunpack.c.l.b16 %v54
  %v116 = vunpack.c.l.b16 %v55
  %v117 = vunpack.c.l.b16 %v56
  %v118 = vunpack.c.l.b16 %v57
  %v119 = vunpack.c.l.b16 %v58
  %v120 = vunpack.c.l.b16 %v59
  %v121 = vunpack.c.l.b16 %v60
  %v122 = vunpack.c.l.b16 %v61
  %v123 = vunpack.c.l.b16 %v62
  %v124 = vunpack.c.l.b16 %v63
  %v125 = vunpack.c.l.b16 %v64
  %v126 = vunpack.c.l.b16 %v65
  %v127 = vunpack.c.l.b16 %v66
  %v128 = vunpack.c.l.b16 %v67
  %v129 = vpack.c.b16 %v105, %v104
  %v130 = vpack.c.b16 %v107, %v106
  %v131 = vpack.c.b16 %v109, %v108
  %v132 = vpack.c.b16 %v111, %v110
  %v133 = vpack.c.b16 %v113, %v112
  %v134 = vpack.c.b16 %v115, %v114
  %v135 = vpack.c.b16 %v117, %v116
  %v136 = vpack.c.b16 %v119, %v118
  %v137 = vpack.c.b16 %v121, %v120
  %v138 = vpack.c.b16 %v123, %v122
  %v139 = vpack.c.b16 %v125, %v124
  %v140 = vpack.c.b16 %v127, %v126
  %v141 = vpack.c.b16 %v128, %v128
  %v146 = vunpack.c.l.b16 %v68
  %v147 = vunpack.c.l.b16 %v69
  %v148 = vunpack.c.l.b16 %v70
  %v149 = vunpack.c.l.b16 %v71
  %v150 = vpack.c.b16 %v147, %v146
  %v151 = vpack.c.b16 %v149, %v148
  %vm154 = vcmask 261120
  %v156 = vsel %vm154, %v129, 0
  %v159 = vsel %vm154, %v130, 0
  %v162 = vsel %vm154, %v131, 0
  %v165 = vsel %vm154, %v132, 0
  %v168 = vsel %vm154, %v133, 0
  %v171 = vsel %vm154, %v134, 0
  %v174 = vsel %vm154, %v135, 0
  %v177 = vsel %vm154, %v136, 0
  %v180 = vsel %vm154, %v137, 0
  %v183 = vsel %vm154, %v138, 0
  %v186 = vsel %vm154, %v139, 0
  %v189 = vsel %vm154, %v140, 0
  %v192 = vsel %vm154, %v141, 0
  %194 = vmatprep.subr.bf16.mxu0 0
  %195 = vmatpush1.bf16.msra.mxu0 %v150
  %196 = vmatprep.subr.bf16.mxu0 0
  %197 = vmatpush1.bf16.msra.mxu0 %v151
  %198 = vmatprep.subr.bf16.mxu0 0
  %199 = vmatpush1.bf16.msra.mxu0 0
  %200 = vmatprep.subr.bf16.mxu0 0
  %201 = vmatpush1.bf16.msra.mxu0 0
  %202 = vmatprep.subr.bf16.mxu0 0
  %203 = vmatpush1.bf16.msra.mxu0 0
  %204 = vmatprep.subr.bf16.mxu0 0
  %205 = vmatpush1.bf16.msra.mxu0 0
  %206 = vmatprep.subr.bf16.mxu0 0
  %207 = vmatpush1.bf16.msra.mxu0 0
  %208 = vmatprep.subr.bf16.mxu0 0
  %209 = vmatpush1.bf16.msra.mxu0 0
  %210 = vmatprep.subr.bf16.mxu0 0
  %211 = vmatpush1.bf16.msra.mxu0 0
  %212 = vmatprep.subr.bf16.mxu0 0
  %213 = vmatpush1.bf16.msra.mxu0 0
  %214 = vmatprep.subr.bf16.mxu0 0
  %215 = vmatpush1.bf16.msra.mxu0 0
  %216 = vmatprep.subr.bf16.mxu0 0
  %217 = vmatpush1.bf16.msra.mxu0 0
  %218 = vmatprep.subr.bf16.mxu0 0
  %219 = vmatpush1.bf16.msra.mxu0 0
  %220 = vmatprep.subr.bf16.mxu0 0
  %221 = vmatpush1.bf16.msra.mxu0 0
  %222 = vmatprep.subr.bf16.mxu0 0
  %223 = vmatpush1.bf16.msra.mxu0 0
  %224 = vmatprep.subr.bf16.mxu0 0
  %225 = vmatpush1.bf16.msra.mxu0 0
  %226 = vmatprep.mubr.bf16.mxu0 0
  %227 = vmatmul.mubr.bf16.gmra.mrb[0].mxu0 %v156
  %v228 = vpop.f32.mrb[0].mxu0
  %v229 = vadd.f32 %v77, %v228
  %v230 = vpop.f32.mrb[0].mxu0
  %v231 = vpop.f32.mrb[0].mxu0
  %v232 = vadd.f32 %v77, %v231
  %v233 = vpop.f32.mrb[0].mxu0
  %234 = vmatprep.mubr.bf16.mxu0 0
  %235 = vmatmul.mubr.bf16.gmra.mrb[0].mxu0 %v159
  %v236 = vpop.f32.mrb[0].mxu0
  %v237 = vadd.f32 %v77, %v236
  %v238 = vpop.f32.mrb[0].mxu0
  %v239 = vpop.f32.mrb[0].mxu0
  %v240 = vadd.f32 %v77, %v239
  %v241 = vpop.f32.mrb[0].mxu0
  %242 = vmatprep.mubr.bf16.mxu0 0
  %243 = vmatmul.mubr.bf16.gmra.mrb[0].mxu0 %v162
  %v244 = vpop.f32.mrb[0].mxu0
  %v245 = vadd.f32 %v77, %v244
  %v246 = vpop.f32.mrb[0].mxu0
  %v247 = vpop.f32.mrb[0].mxu0
  %v248 = vadd.f32 %v77, %v247
  %v249 = vpop.f32.mrb[0].mxu0
  %250 = vmatprep.mubr.bf16.mxu0 0
  %251 = vmatmul.mubr.bf16.gmra.mrb[0].mxu0 %v165
  %v252 = vpop.f32.mrb[0].mxu0
  %v253 = vadd.f32 %v77, %v252
  %v254 = vpop.f32.mrb[0].mxu0
  %v255 = vpop.f32.mrb[0].mxu0
  %v256 = vadd.f32 %v77, %v255
  %v257 = vpop.f32.mrb[0].mxu0
  %258 = vmatprep.mubr.bf16.mxu0 0
  %259 = vmatmul.mubr.bf16.gmra.mrb[0].mxu0 %v168
  %v260 = vpop.f32.mrb[0].mxu0
  %v261 = vadd.f32 %v77, %v260
  %v262 = vpop.f32.mrb[0].mxu0
  %v263 = vpop.f32.mrb[0].mxu0
  %v264 = vadd.f32 %v77, %v263
  %v265 = vpop.f32.mrb[0].mxu0
  %266 = vmatprep.mubr.bf16.mxu0 0
  %267 = vmatmul.mubr.bf16.gmra.mrb[0].mxu0 %v171
  %v268 = vpop.f32.mrb[0].mxu0
  %v269 = vadd.f32 %v77, %v268
  %v270 = vpop.f32.mrb[0].mxu0
  %v271 = vpop.f32.mrb[0].mxu0
  %v272 = vadd.f32 %v77, %v271
  %v273 = vpop.f32.mrb[0].mxu0
  %274 = vmatprep.mubr.bf16.mxu0 0
  %275 = vmatmul.mubr.bf16.gmra.mrb[0].mxu0 %v174
  %v276 = vpop.f32.mrb[0].mxu0
  %v277 = vadd.f32 %v77, %v276
  %v278 = vpop.f32.mrb[0].mxu0
  %v279 = vpop.f32.mrb[0].mxu0
  %v280 = vadd.f32 %v77, %v279
  %v281 = vpop.f32.mrb[0].mxu0
  %282 = vmatprep.mubr.bf16.mxu0 0
  %283 = vmatmul.mubr.bf16.gmra.mrb[0].mxu0 %v177
  %v284 = vpop.f32.mrb[0].mxu0
  %v285 = vadd.f32 %v77, %v284
  %v286 = vpop.f32.mrb[0].mxu0
  %v287 = vpop.f32.mrb[0].mxu0
  %v288 = vadd.f32 %v77, %v287
  %v289 = vpop.f32.mrb[0].mxu0
  %290 = vmatprep.mubr.bf16.mxu0 0
  %291 = vmatmul.mubr.bf16.gmra.mrb[0].mxu0 %v180
  %v292 = vpop.f32.mrb[0].mxu0
  %v293 = vadd.f32 %v77, %v292
  %v294 = vpop.f32.mrb[0].mxu0
  %v295 = vpop.f32.mrb[0].mxu0
  %v296 = vadd.f32 %v77, %v295
  %v297 = vpop.f32.mrb[0].mxu0
  %298 = vmatprep.mubr.bf16.mxu0 0
  %299 = vmatmul.mubr.bf16.gmra.mrb[0].mxu0 %v183
  %v300 = vpop.f32.mrb[0].mxu0
  %v301 = vadd.f32 %v77, %v300
  %v302 = vpop.f32.mrb[0].mxu0
  %v303 = vpop.f32.mrb[0].mxu0
  %v304 = vadd.f32 %v77, %v303
  %v305 = vpop.f32.mrb[0].mxu0
  %306 = vmatprep.mubr.bf16.mxu0 0
  %307 = vmatmul.mubr.bf16.gmra.mrb[0].mxu0 %v186
  %v308 = vpop.f32.mrb[0].mxu0
  %v309 = vadd.f32 %v77, %v308
  %v310 = vpop.f32.mrb[0].mxu0
  %v311 = vpop.f32.mrb[0].mxu0
  %v312 = vadd.f32 %v77, %v311
  %v313 = vpop.f32.mrb[0].mxu0
  %314 = vmatprep.mubr.bf16.mxu0 0
  %315 = vmatmul.mubr.bf16.gmra.mrb[0].mxu0 %v189
  %v316 = vpop.f32.mrb[0].mxu0
  %v317 = vadd.f32 %v77, %v316
  %v318 = vpop.f32.mrb[0].mxu0
  %v319 = vpop.f32.mrb[0].mxu0
  %v320 = vadd.f32 %v77, %v319
  %v321 = vpop.f32.mrb[0].mxu0
  %322 = vmatprep.mubr.bf16.mxu0 0
  %323 = vmatmul.mubr.bf16.gmra.mrb[0].mxu0 %v192
  %v324 = vpop.f32.mrb[0].mxu0
  %v325 = vadd.f32 %v77, %v324
  %v326 = vpop.f32.mrb[0].mxu0
  %v327 = vpop.f32.mrb[0].mxu0
  %v328 = vpop.f32.mrb[0].mxu0
  %329 = vdwg.mxu0
  %v330 = vtanh.pop %v229
  %v331 = vtanh.pop %v232
  %v332 = vtanh.pop %v237
  %v333 = vtanh.pop %v240
  %v334 = vtanh.pop %v245
  %v335 = vtanh.pop %v248
  %v336 = vtanh.pop %v253
  %v337 = vtanh.pop %v256
  %v338 = vtanh.pop %v261
  %v339 = vtanh.pop %v264
  %v340 = vtanh.pop %v269
  %v341 = vtanh.pop %v272
  %v342 = vtanh.pop %v277
  %v343 = vtanh.pop %v280
  %v344 = vtanh.pop %v285
  %v345 = vtanh.pop %v288
  %v346 = vtanh.pop %v293
  %v347 = vtanh.pop %v296
  %v348 = vtanh.pop %v301
  %v349 = vtanh.pop %v304
  %v350 = vtanh.pop %v309
  %v351 = vtanh.pop %v312
  %v352 = vtanh.pop %v317
  %v353 = vtanh.pop %v320
  %v354 = vtanh.pop %v325
  %v355 = vpack.c.bf16 %v331, %v330
  %v356 = vpack.c.bf16 %v333, %v332
  %v357 = vpack.c.bf16 %v335, %v334
  %v358 = vpack.c.bf16 %v337, %v336
  %v359 = vpack.c.bf16 %v339, %v338
  %v360 = vpack.c.bf16 %v341, %v340
  %v361 = vpack.c.bf16 %v343, %v342
  %v362 = vpack.c.bf16 %v345, %v344
  %v363 = vpack.c.bf16 %v347, %v346
  %v364 = vpack.c.bf16 %v349, %v348
  %v365 = vpack.c.bf16 %v351, %v350
  %v366 = vpack.c.bf16 %v353, %v352
  %v367 = vpack.c.bf16 %v354, %v354
  %v368 = vld [vmem:[%s3] sm:$0xf]
  %v369 = vld [vmem:[%s3 + $0x4] sm:$0xf]
  %v370 = vld [vmem:[%s3 + $0x8] sm:$0x3]
  %v371 = vld [vmem:[%s4] sm:$0x1]
  %v373 = vlaneseq
  %v374 = vshrl.u32 %v373, 7
  %v375 = vsub.s32 0, %v374
  %v376 = vrot.slane %v371, %v375
  %v381 = vunpack.c.l.b16 %v368
  %v382 = vunpack.c.l.b16 %v369
  %v383 = vunpack.c.l.b16 %v370
  %v384 = vpack.c.b16 %v382, %v381
  %v385 = vpack.c.b16 %v383, %v383
  %vm387 = vcmask 162816
  %v389 = vsel %vm387, %v355, 0
  %v392 = vsel %vm387, %v356, 0
  %v395 = vsel %vm387, %v357, 0
  %v398 = vsel %vm387, %v358, 0
  %v401 = vsel %vm387, %v359, 0
  %v404 = vsel %vm387, %v360, 0
  %v407 = vsel %vm387, %v361, 0
  %v410 = vsel %vm387, %v362, 0
  %v413 = vsel %vm387, %v363, 0
  %v416 = vsel %vm387, %v364, 0
  %v419 = vsel %vm387, %v365, 0
  %v422 = vsel %vm387, %v366, 0
  %v425 = vsel %vm387, %v367, 0
  %vm427 = vcmask 1041408
  %v429 = vsel %vm427, %v385, 0
  %431 = vmatprep.subr.bf16.mxu0 0
  %432 = vmatpush1.bf16.msra.mxu0 %v384
  %433 = vmatprep.subr.bf16.mxu0 0
  %434 = vmatpush1.bf16.msra.mxu0 %v429
  %435 = vmatprep.subr.bf16.mxu0 0
  %436 = vmatpush1.bf16.msra.mxu0 0
  %437 = vmatprep.subr.bf16.mxu0 0
  %438 = vmatpush1.bf16.msra.mxu0 0
  %439 = vmatprep.subr.bf16.mxu0 0
  %440 = vmatpush1.bf16.msra.mxu0 0
  %441 = vmatprep.subr.bf16.mxu0 0
  %442 = vmatpush1.bf16.msra.mxu0 0
  %443 = vmatprep.subr.bf16.mxu0 0
  %444 = vmatpush1.bf16.msra.mxu0 0
  %445 = vmatprep.subr.bf16.mxu0 0
  %446 = vmatpush1.bf16.msra.mxu0 0
  %447 = vmatprep.subr.bf16.mxu0 0
  %448 = vmatpush1.bf16.msra.mxu0 0
  %449 = vmatprep.subr.bf16.mxu0 0
  %450 = vmatpush1.bf16.msra.mxu0 0
  %451 = vmatprep.subr.bf16.mxu0 0
  %452 = vmatpush1.bf16.msra.mxu0 0
  %453 = vmatprep.subr.bf16.mxu0 0
  %454 = vmatpush1.bf16.msra.mxu0 0
  %455 = vmatprep.subr.bf16.mxu0 0
  %456 = vmatpush1.bf16.msra.mxu0 0
  %457 = vmatprep.subr.bf16.mxu0 0
  %458 = vmatpush1.bf16.msra.mxu0 0
  %459 = vmatprep.subr.bf16.mxu0 0
  %460 = vmatpush1.bf16.msra.mxu0 0
  %461 = vmatprep.subr.bf16.mxu0 0
  %462 = vmatpush1.bf16.msra.mxu0 0
  %463 = vmatprep.mubr.bf16.mxu0 0
  %464 = vmatmul.mubr.bf16.gmra.mrb[0].mxu0 %v389
  %v465 = vpop.f32.mrb[0].mxu0
  %v466 = vadd.f32 %v376, %v465
  %v467 = vpop.f32.mrb[0].mxu0
  %v468 = vpop.f32.mrb[0].mxu0
  %v469 = vadd.f32 %v376, %v468
  %v470 = vpop.f32.mrb[0].mxu0
  %471 = vmatprep.mubr.bf16.mxu0 0
  %472 = vmatmul.mubr.bf16.gmra.mrb[0].mxu0 %v392
  %v473 = vpop.f32.mrb[0].mxu0
  %v474 = vadd.f32 %v376, %v473
  %v475 = vpop.f32.mrb[0].mxu0
  %v476 = vpop.f32.mrb[0].mxu0
  %v477 = vadd.f32 %v376, %v476
  %v478 = vpop.f32.mrb[0].mxu0
  %479 = vmatprep.mubr.bf16.mxu0 0
  %480 = vmatmul.mubr.bf16.gmra.mrb[0].mxu0 %v395
  %v481 = vpop.f32.mrb[0].mxu0
  %v482 = vadd.f32 %v376, %v481
  %v483 = vpop.f32.mrb[0].mxu0
  %v484 = vpop.f32.mrb[0].mxu0
  %v485 = vadd.f32 %v376, %v484
  %v486 = vpop.f32.mrb[0].mxu0
  %487 = vmatprep.mubr.bf16.mxu0 0
  %488 = vmatmul.mubr.bf16.gmra.mrb[0].mxu0 %v398
  %v489 = vpop.f32.mrb[0].mxu0
  %v490 = vadd.f32 %v376, %v489
  %v491 = vpop.f32.mrb[0].mxu0
  %v492 = vpop.f32.mrb[0].mxu0
  %v493 = vadd.f32 %v376, %v492
  %v494 = vpop.f32.mrb[0].mxu0
  %495 = vmatprep.mubr.bf16.mxu0 0
  %496 = vmatmul.mubr.bf16.gmra.mrb[0].mxu0 %v401
  %v497 = vpop.f32.mrb[0].mxu0
  %v498 = vadd.f32 %v376, %v497
  %v499 = vpop.f32.mrb[0].mxu0
  %v500 = vpop.f32.mrb[0].mxu0
  %v501 = vadd.f32 %v376, %v500
  %v502 = vpop.f32.mrb[0].mxu0
  %503 = vmatprep.mubr.bf16.mxu0 0
  %504 = vmatmul.mubr.bf16.gmra.mrb[0].mxu0 %v404
  %v505 = vpop.f32.mrb[0].mxu0
  %v506 = vadd.f32 %v376, %v505
  %v507 = vpop.f32.mrb[0].mxu0
  %v508 = vpop.f32.mrb[0].mxu0
  %v509 = vadd.f32 %v376, %v508
  %v510 = vpop.f32.mrb[0].mxu0
  %511 = vmatprep.mubr.bf16.mxu0 0
  %512 = vmatmul.mubr.bf16.gmra.mrb[0].mxu0 %v407
  %v513 = vpop.f32.mrb[0].mxu0
  %v514 = vadd.f32 %v376, %v513
  %v515 = vpop.f32.mrb[0].mxu0
  %v516 = vpop.f32.mrb[0].mxu0
  %v517 = vadd.f32 %v376, %v516
  %v518 = vpop.f32.mrb[0].mxu0
  %519 = vmatprep.mubr.bf16.mxu0 0
  %520 = vmatmul.mubr.bf16.gmra.mrb[0].mxu0 %v410
  %v521 = vpop.f32.mrb[0].mxu0
  %v522 = vadd.f32 %v376, %v521
  %v523 = vpop.f32.mrb[0].mxu0
  %v524 = vpop.f32.mrb[0].mxu0
  %v525 = vadd.f32 %v376, %v524
  %v526 = vpop.f32.mrb[0].mxu0
  %527 = vmatprep.mubr.bf16.mxu0 0
  %528 = vmatmul.mubr.bf16.gmra.mrb[0].mxu0 %v413
  %v529 = vpop.f32.mrb[0].mxu0
  %v530 = vadd.f32 %v376, %v529
  %v531 = vpop.f32.mrb[0].mxu0
  %v532 = vpop.f32.mrb[0].mxu0
  %v533 = vadd.f32 %v376, %v532
  %v534 = vpop.f32.mrb[0].mxu0
  %535 = vmatprep.mubr.bf16.mxu0 0
  %536 = vmatmul.mubr.bf16.gmra.mrb[0].mxu0 %v416
  %v537 = vpop.f32.mrb[0].mxu0
  %v538 = vadd.f32 %v376, %v537
  %v539 = vpop.f32.mrb[0].mxu0
  %v540 = vpop.f32.mrb[0].mxu0
  %v541 = vadd.f32 %v376, %v540
  %v542 = vpop.f32.mrb[0].mxu0
  %543 = vmatprep.mubr.bf16.mxu0 0
  %544 = vmatmul.mubr.bf16.gmra.mrb[0].mxu0 %v419
  %v545 = vpop.f32.mrb[0].mxu0
  %v546 = vadd.f32 %v376, %v545
  %v547 = vpop.f32.mrb[0].mxu0
  %v548 = vpop.f32.mrb[0].mxu0
  %v549 = vadd.f32 %v376, %v548
  %v550 = vpop.f32.mrb[0].mxu0
  %551 = vmatprep.mubr.bf16.mxu0 0
  %552 = vmatmul.mubr.bf16.gmra.mrb[0].mxu0 %v422
  %v553 = vpop.f32.mrb[0].mxu0
  %v554 = vadd.f32 %v376, %v553
  %v555 = vpop.f32.mrb[0].mxu0
  %v556 = vpop.f32.mrb[0].mxu0
  %v557 = vadd.f32 %v376, %v556
  %v558 = vpop.f32.mrb[0].mxu0
  %559 = vmatprep.mubr.bf16.mxu0 0
  %560 = vmatmul.mubr.bf16.gmra.mrb[0].mxu0 %v425
  %v561 = vpop.f32.mrb[0].mxu0
  %v562 = vadd.f32 %v376, %v561
  %v563 = vpop.f32.mrb[0].mxu0
  %v564 = vpop.f32.mrb[0].mxu0
  %v565 = vpop.f32.mrb[0].mxu0
  %566 = vdwg.mxu0
  %v567 = vmul.f32 %v466, 0.5
  %v568 = vmul.f32 %v469, 0.5
  %v569 = vmul.f32 %v474, 0.5
  %v570 = vmul.f32 %v477, 0.5
  %v571 = vmul.f32 %v482, 0.5
  %v572 = vmul.f32 %v485, 0.5
  %v573 = vmul.f32 %v490, 0.5
  %v574 = vmul.f32 %v493, 0.5
  %v575 = vmul.f32 %v498, 0.5
  %v576 = vmul.f32 %v501, 0.5
  %v577 = vmul.f32 %v506, 0.5
  %v578 = vmul.f32 %v509, 0.5
  %v579 = vmul.f32 %v514, 0.5
  %v580 = vmul.f32 %v517, 0.5
  %v581 = vmul.f32 %v522, 0.5
  %v582 = vmul.f32 %v525, 0.5
  %v583 = vmul.f32 %v530, 0.5
  %v584 = vmul.f32 %v533, 0.5
  %v585 = vmul.f32 %v538, 0.5
  %v586 = vmul.f32 %v541, 0.5
  %v587 = vmul.f32 %v546, 0.5
  %v588 = vmul.f32 %v549, 0.5
  %v589 = vmul.f32 %v554, 0.5
  %v590 = vmul.f32 %v557, 0.5
  %v591 = vmul.f32 %v562, 0.5
  %v592 = vtanh.pop %v567
  %v593 = vtanh.pop %v568
  %v594 = vtanh.pop %v569
  %v595 = vtanh.pop %v570
  %v596 = vtanh.pop %v571
  %v597 = vtanh.pop %v572
  %v598 = vtanh.pop %v573
  %v599 = vtanh.pop %v574
  %v600 = vtanh.pop %v575
  %v601 = vtanh.pop %v576
  %v602 = vtanh.pop %v577
  %v603 = vtanh.pop %v578
  %v604 = vtanh.pop %v579
  %v605 = vtanh.pop %v580
  %v606 = vtanh.pop %v581
  %v607 = vtanh.pop %v582
  %v608 = vtanh.pop %v583
  %v609 = vtanh.pop %v584
  %v610 = vtanh.pop %v585
  %v611 = vtanh.pop %v586
  %v612 = vtanh.pop %v587
  %v613 = vtanh.pop %v588
  %v614 = vtanh.pop %v589
  %v615 = vtanh.pop %v590
  %v616 = vtanh.pop %v591
  %v617 = vadd.f32 %v592, 1.0
  %v618 = vadd.f32 %v593, 1.0
  %v619 = vadd.f32 %v594, 1.0
  %v620 = vadd.f32 %v595, 1.0
  %v621 = vadd.f32 %v596, 1.0
  %v622 = vadd.f32 %v597, 1.0
  %v623 = vadd.f32 %v598, 1.0
  %v624 = vadd.f32 %v599, 1.0
  %v625 = vadd.f32 %v600, 1.0
  %v626 = vadd.f32 %v601, 1.0
  %v627 = vadd.f32 %v602, 1.0
  %v628 = vadd.f32 %v603, 1.0
  %v629 = vadd.f32 %v604, 1.0
  %v630 = vadd.f32 %v605, 1.0
  %v631 = vadd.f32 %v606, 1.0
  %v632 = vadd.f32 %v607, 1.0
  %v633 = vadd.f32 %v608, 1.0
  %v634 = vadd.f32 %v609, 1.0
  %v635 = vadd.f32 %v610, 1.0
  %v636 = vadd.f32 %v611, 1.0
  %v637 = vadd.f32 %v612, 1.0
  %v638 = vadd.f32 %v613, 1.0
  %v639 = vadd.f32 %v614, 1.0
  %v640 = vadd.f32 %v615, 1.0
  %v641 = vadd.f32 %v616, 1.0
  %v642 = vmul.f32 %v617, 0.5
  %v643 = vmul.f32 %v618, 0.5
  %v644 = vmul.f32 %v619, 0.5
  %v645 = vmul.f32 %v620, 0.5
  %v646 = vmul.f32 %v621, 0.5
  %v647 = vmul.f32 %v622, 0.5
  %v648 = vmul.f32 %v623, 0.5
  %v649 = vmul.f32 %v624, 0.5
  %v650 = vmul.f32 %v625, 0.5
  %v651 = vmul.f32 %v626, 0.5
  %v652 = vmul.f32 %v627, 0.5
  %v653 = vmul.f32 %v628, 0.5
  %v654 = vmul.f32 %v629, 0.5
  %v655 = vmul.f32 %v630, 0.5
  %v656 = vmul.f32 %v631, 0.5
  %v657 = vmul.f32 %v632, 0.5
  %v658 = vmul.f32 %v633, 0.5
  %v659 = vmul.f32 %v634, 0.5
  %v660 = vmul.f32 %v635, 0.5
  %v661 = vmul.f32 %v636, 0.5
  %v662 = vmul.f32 %v637, 0.5
  %v663 = vmul.f32 %v638, 0.5
  %v664 = vmul.f32 %v639, 0.5
  %v665 = vmul.f32 %v640, 0.5
  %v666 = vmul.f32 %v641, 0.5
  %v667 = vunpack.c.l.bf16 %v43
  %v668 = vunpack.c.l.bf16 %v44
  %v669 = vunpack.c.l.bf16 %v45
  %v670 = vunpack.c.l.bf16 %v46
  %v671 = vunpack.c.l.bf16 %v47
  %v672 = vunpack.c.l.bf16 %v48
  %v673 = vunpack.c.l.bf16 %v49
  %v674 = vunpack.c.l.bf16 %v50
  %v675 = vunpack.c.l.bf16 %v51
  %v676 = vunpack.c.l.bf16 %v52
  %v677 = vunpack.c.l.bf16 %v53
  %v678 = vunpack.c.l.bf16 %v54
  %v679 = vunpack.c.l.bf16 %v55
  %v680 = vunpack.c.l.bf16 %v56
  %v681 = vunpack.c.l.bf16 %v57
  %v682 = vunpack.c.l.bf16 %v58
  %v683 = vunpack.c.l.bf16 %v59
  %v684 = vunpack.c.l.bf16 %v60
  %v685 = vunpack.c.l.bf16 %v61
  %v686 = vunpack.c.l.bf16 %v62
  %v687 = vunpack.c.l.bf16 %v63
  %v688 = vunpack.c.l.bf16 %v64
  %v689 = vunpack.c.l.bf16 %v65
  %v690 = vunpack.c.l.bf16 %v66
  %v691 = vunpack.c.l.bf16 %v67
  %v692 = vmul.f32 %v667, %v642
  %v693 = vmul.f32 %v668, %v643
  %v694 = vmul.f32 %v669, %v644
  %v695 = vmul.f32 %v670, %v645
  %v696 = vmul.f32 %v671, %v646
  %v697 = vmul.f32 %v672, %v647
  %v698 = vmul.f32 %v673, %v648
  %v699 = vmul.f32 %v674, %v649
  %v700 = vmul.f32 %v675, %v650
  %v701 = vmul.f32 %v676, %v651
  %v702 = vmul.f32 %v677, %v652
  %v703 = vmul.f32 %v678, %v653
  %v704 = vmul.f32 %v679, %v654
  %v705 = vmul.f32 %v680, %v655
  %v706 = vmul.f32 %v681, %v656
  %v707 = vmul.f32 %v682, %v657
  %v708 = vmul.f32 %v683, %v658
  %v709 = vmul.f32 %v684, %v659
  %v710 = vmul.f32 %v685, %v660
  %v711 = vmul.f32 %v686, %v661
  %v712 = vmul.f32 %v687, %v662
  %v713 = vmul.f32 %v688, %v663
  %v714 = vmul.f32 %v689, %v664
  %v715 = vmul.f32 %v690, %v665
  %v716 = vmul.f32 %v691, %v666
  %v717 = vpack.c.bf16 %v693, %v692
  %v718 = vpack.c.bf16 %v695, %v694
  %v719 = vpack.c.bf16 %v697, %v696
  %v720 = vpack.c.bf16 %v699, %v698
  %v721 = vpack.c.bf16 %v701, %v700
  %v722 = vpack.c.bf16 %v703, %v702
  %v723 = vpack.c.bf16 %v705, %v704
  %v724 = vpack.c.bf16 %v707, %v706
  %v725 = vpack.c.bf16 %v709, %v708
  %v726 = vpack.c.bf16 %v711, %v710
  %v727 = vpack.c.bf16 %v713, %v712
  %v728 = vpack.c.bf16 %v715, %v714
  %v729 = vpack.c.bf16 %v716, %v716
  %v730 = vld [vmem:[%s5] sm:$0xf]
  %v731 = vld [vmem:[%s5 + $0x4] sm:$0xf]
  %v732 = vld [vmem:[%s5 + $0x8] sm:$0xf]
  %v733 = vld [vmem:[%s5 + $0xc] sm:$0xf]
  %v734 = vld [vmem:[%s6] sm:$0x1]
  %v736 = vlaneseq
  %v737 = vshrl.u32 %v736, 7
  %v738 = vsub.s32 0, %v737
  %v739 = vrot.slane %v734, %v738
  %v745 = vunpack.c.l.b16 %v730
  %v746 = vunpack.c.l.b16 %v731
  %v747 = vunpack.c.l.b16 %v732
  %v748 = vunpack.c.l.b16 %v733
  %v749 = vpack.c.b16 %v746, %v745
  %v750 = vpack.c.b16 %v748, %v747
  %v754 = vsel %vm154, %v717, 0
  %v757 = vsel %vm154, %v718, 0
  %v760 = vsel %vm154, %v719, 0
  %v763 = vsel %vm154, %v720, 0
  %v766 = vsel %vm154, %v721, 0
  %v769 = vsel %vm154, %v722, 0
  %v772 = vsel %vm154, %v723, 0
  %v775 = vsel %vm154, %v724, 0
  %v778 = vsel %vm154, %v725, 0
  %v781 = vsel %vm154, %v726, 0
  %v784 = vsel %vm154, %v727, 0
  %v787 = vsel %vm154, %v728, 0
  %v790 = vsel %vm154, %v729, 0
  %792 = vmatprep.subr.bf16.mxu0 0
  %793 = vmatpush1.bf16.msra.mxu0 %v749
  %794 = vmatprep.subr.bf16.mxu0 0
  %795 = vmatpush1.bf16.msra.mxu0 %v750
  %796 = vmatprep.subr.bf16.mxu0 0
  %797 = vmatpush1.bf16.msra.mxu0 0
  %798 = vmatprep.subr.bf16.mxu0 0
  %799 = vmatpush1.bf16.msra.mxu0 0
  %800 = vmatprep.subr.bf16.mxu0 0
  %801 = vmatpush1.bf16.msra.mxu0 0
  %802 = vmatprep.subr.bf16.mxu0 0
  %803 = vmatpush1.bf16.msra.mxu0 0
  %804 = vmatprep.subr.bf16.mxu0 0
  %805 = vmatpush1.bf16.msra.mxu0 0
  %806 = vmatprep.subr.bf16.mxu0 0
  %807 = vmatpush1.bf16.msra.mxu0 0
  %808 = vmatprep.subr.bf16.mxu0 0
  %809 = vmatpush1.bf16.msra.mxu0 0
  %810 = vmatprep.subr.bf16.mxu0 0
  %811 = vmatpush1.bf16.msra.mxu0 0
  %812 = vmatprep.subr.bf16.mxu0 0
  %813 = vmatpush1.bf16.msra.mxu0 0
  %814 = vmatprep.subr.bf16.mxu0 0
  %815 = vmatpush1.bf16.msra.mxu0 0
  %816 = vmatprep.subr.bf16.mxu0 0
  %817 = vmatpush1.bf16.msra.mxu0 0
  %818 = vmatprep.subr.bf16.mxu0 0
  %819 = vmatpush1.bf16.msra.mxu0 0
  %820 = vmatprep.subr.bf16.mxu0 0
  %821 = vmatpush1.bf16.msra.mxu0 0
  %822 = vmatprep.subr.bf16.mxu0 0
  %823 = vmatpush1.bf16.msra.mxu0 0
  %824 = vmatprep.mubr.bf16.mxu0 0
  %825 = vmatmul.mubr.bf16.gmra.mrb[0].mxu0 %v754
  %v826 = vpop.f32.mrb[0].mxu0
  %v827 = vadd.f32 %v739, %v826
  %v828 = vpop.f32.mrb[0].mxu0
  %v829 = vpop.f32.mrb[0].mxu0
  %v830 = vadd.f32 %v739, %v829
  %v831 = vpop.f32.mrb[0].mxu0
  %832 = vmatprep.mubr.bf16.mxu0 0
  %833 = vmatmul.mubr.bf16.gmra.mrb[0].mxu0 %v757
  %v834 = vpop.f32.mrb[0].mxu0
  %v835 = vadd.f32 %v739, %v834
  %v836 = vpop.f32.mrb[0].mxu0
  %v837 = vpop.f32.mrb[0].mxu0
  %v838 = vadd.f32 %v739, %v837
  %v839 = vpop.f32.mrb[0].mxu0
  %840 = vmatprep.mubr.bf16.mxu0 0
  %841 = vmatmul.mubr.bf16.gmra.mrb[0].mxu0 %v760
  %v842 = vpop.f32.mrb[0].mxu0
  %v843 = vadd.f32 %v739, %v842
  %v844 = vpop.f32.mrb[0].mxu0
  %v845 = vpop.f32.mrb[0].mxu0
  %v846 = vadd.f32 %v739, %v845
  %v847 = vpop.f32.mrb[0].mxu0
  %848 = vmatprep.mubr.bf16.mxu0 0
  %849 = vmatmul.mubr.bf16.gmra.mrb[0].mxu0 %v763
  %v850 = vpop.f32.mrb[0].mxu0
  %v851 = vadd.f32 %v739, %v850
  %v852 = vpop.f32.mrb[0].mxu0
  %v853 = vpop.f32.mrb[0].mxu0
  %v854 = vadd.f32 %v739, %v853
  %v855 = vpop.f32.mrb[0].mxu0
  %856 = vmatprep.mubr.bf16.mxu0 0
  %857 = vmatmul.mubr.bf16.gmra.mrb[0].mxu0 %v766
  %v858 = vpop.f32.mrb[0].mxu0
  %v859 = vadd.f32 %v739, %v858
  %v860 = vpop.f32.mrb[0].mxu0
  %v861 = vpop.f32.mrb[0].mxu0
  %v862 = vadd.f32 %v739, %v861
  %v863 = vpop.f32.mrb[0].mxu0
  %864 = vmatprep.mubr.bf16.mxu0 0
  %865 = vmatmul.mubr.bf16.gmra.mrb[0].mxu0 %v769
  %v866 = vpop.f32.mrb[0].mxu0
  %v867 = vadd.f32 %v739, %v866
  %v868 = vpop.f32.mrb[0].mxu0
  %v869 = vpop.f32.mrb[0].mxu0
  %v870 = vadd.f32 %v739, %v869
  %v871 = vpop.f32.mrb[0].mxu0
  %872 = vmatprep.mubr.bf16.mxu0 0
  %873 = vmatmul.mubr.bf16.gmra.mrb[0].mxu0 %v772
  %v874 = vpop.f32.mrb[0].mxu0
  %v875 = vadd.f32 %v739, %v874
  %v876 = vpop.f32.mrb[0].mxu0
  %v877 = vpop.f32.mrb[0].mxu0
  %v878 = vadd.f32 %v739, %v877
  %v879 = vpop.f32.mrb[0].mxu0
  %880 = vmatprep.mubr.bf16.mxu0 0
  %881 = vmatmul.mubr.bf16.gmra.mrb[0].mxu0 %v775
  %v882 = vpop.f32.mrb[0].mxu0
  %v883 = vadd.f32 %v739, %v882
  %v884 = vpop.f32.mrb[0].mxu0
  %v885 = vpop.f32.mrb[0].mxu0
  %v886 = vadd.f32 %v739, %v885
  %v887 = vpop.f32.mrb[0].mxu0
  %888 = vmatprep.mubr.bf16.mxu0 0
  %889 = vmatmul.mubr.bf16.gmra.mrb[0].mxu0 %v778
  %v890 = vpop.f32.mrb[0].mxu0
  %v891 = vadd.f32 %v739, %v890
  %v892 = vpop.f32.mrb[0].mxu0
  %v893 = vpop.f32.mrb[0].mxu0
  %v894 = vadd.f32 %v739, %v893
  %v895 = vpop.f32.mrb[0].mxu0
  %896 = vmatprep.mubr.bf16.mxu0 0
  %897 = vmatmul.mubr.bf16.gmra.mrb[0].mxu0 %v781
  %v898 = vpop.f32.mrb[0].mxu0
  %v899 = vadd.f32 %v739, %v898
  %v900 = vpop.f32.mrb[0].mxu0
  %v901 = vpop.f32.mrb[0].mxu0
  %v902 = vadd.f32 %v739, %v901
  %v903 = vpop.f32.mrb[0].mxu0
  %904 = vmatprep.mubr.bf16.mxu0 0
  %905 = vmatmul.mubr.bf16.gmra.mrb[0].mxu0 %v784
  %v906 = vpop.f32.mrb[0].mxu0
  %v907 = vadd.f32 %v739, %v906
  %v908 = vpop.f32.mrb[0].mxu0
  %v909 = vpop.f32.mrb[0].mxu0
  %v910 = vadd.f32 %v739, %v909
  %v911 = vpop.f32.mrb[0].mxu0
  %912 = vmatprep.mubr.bf16.mxu0 0
  %913 = vmatmul.mubr.bf16.gmra.mrb[0].mxu0 %v787
  %v914 = vpop.f32.mrb[0].mxu0
  %v915 = vadd.f32 %v739, %v914
  %v916 = vpop.f32.mrb[0].mxu0
  %v917 = vpop.f32.mrb[0].mxu0
  %v918 = vadd.f32 %v739, %v917
  %v919 = vpop.f32.mrb[0].mxu0
  %920 = vmatprep.mubr.bf16.mxu0 0
  %921 = vmatmul.mubr.bf16.gmra.mrb[0].mxu0 %v790
  %v922 = vpop.f32.mrb[0].mxu0
  %v923 = vadd.f32 %v739, %v922
  %v924 = vpop.f32.mrb[0].mxu0
  %v925 = vpop.f32.mrb[0].mxu0
  %v926 = vpop.f32.mrb[0].mxu0
  %927 = vdwg.mxu0
  %v928 = vmax.f32 %v827, 0.0
  %v929 = vmax.f32 %v830, 0.0
  %v930 = vmax.f32 %v835, 0.0
  %v931 = vmax.f32 %v838, 0.0
  %v932 = vmax.f32 %v843, 0.0
  %v933 = vmax.f32 %v846, 0.0
  %v934 = vmax.f32 %v851, 0.0
  %v935 = vmax.f32 %v854, 0.0
  %v936 = vmax.f32 %v859, 0.0
  %v937 = vmax.f32 %v862, 0.0
  %v938 = vmax.f32 %v867, 0.0
  %v939 = vmax.f32 %v870, 0.0
  %v940 = vmax.f32 %v875, 0.0
  %v941 = vmax.f32 %v878, 0.0
  %v942 = vmax.f32 %v883, 0.0
  %v943 = vmax.f32 %v886, 0.0
  %v944 = vmax.f32 %v891, 0.0
  %v945 = vmax.f32 %v894, 0.0
  %v946 = vmax.f32 %v899, 0.0
  %v947 = vmax.f32 %v902, 0.0
  %v948 = vmax.f32 %v907, 0.0
  %v949 = vmax.f32 %v910, 0.0
  %v950 = vmax.f32 %v915, 0.0
  %v951 = vmax.f32 %v918, 0.0
  %v952 = vmax.f32 %v923, 0.0
  %v953 = vpack.c.bf16 %v929, %v928
  %v954 = vpack.c.bf16 %v931, %v930
  %v955 = vpack.c.bf16 %v933, %v932
  %v956 = vpack.c.bf16 %v935, %v934
  %v957 = vpack.c.bf16 %v937, %v936
  %v958 = vpack.c.bf16 %v939, %v938
  %v959 = vpack.c.bf16 %v941, %v940
  %v960 = vpack.c.bf16 %v943, %v942
  %v961 = vpack.c.bf16 %v945, %v944
  %v962 = vpack.c.bf16 %v947, %v946
  %v963 = vpack.c.bf16 %v949, %v948
  %v964 = vpack.c.bf16 %v951, %v950
  %v965 = vpack.c.bf16 %v952, %v952
  %v966 = vld [vmem:[%s7] sm:$0xf]
  %v967 = vld [vmem:[%s7 + $0x4] sm:$0xf]
  %v968 = vld [vmem:[%s7 + $0x8] sm:$0xf]
  %v969 = vld [vmem:[%s7 + $0xc] sm:$0xf]
  %v970 = vld [vmem:[%s7 + $0x10] sm:$0xf]
  %v971 = vld [vmem:[%s7 + $0x14] sm:$0xf]
  %v972 = vld [vmem:[%s7 + $0x18] sm:$0xf]
  %v973 = vld [vmem:[%s7 + $0x1c] sm:$0xf]
  %v974 = vld [vmem:[%s7 + $0x20] sm:$0xf]
  %v975 = vld [vmem:[%s7 + $0x24] sm:$0xf]
  %v976 = vld [vmem:[%s7 + $0x28] sm:$0xf]
  %v977 = vld [vmem:[%s7 + $0x2c] sm:$0xf]
  %v978 = vld [vmem:[%s7 + $0x30] sm:$0xf]
  %v979 = vld [vmem:[%s7 + $0x34] sm:$0xf]
  %v980 = vld [vmem:[%s7 + $0x38] sm:$0xf]
  %v981 = vld [vmem:[%s7 + $0x3c] sm:$0xf]
  %v982 = vld [vmem:[%s8] sm:$0x1]
  %v984 = vlaneseq
  %v985 = vshrl.u32 %v984, 7
  %v986 = vsub.s32 0, %v985
  %v987 = vrot.slane %v982, %v986
  %v1005 = vunpack.c.l.b16 %v966
  %v1006 = vunpack.c.l.b16 %v967
  %v1007 = vunpack.c.l.b16 %v968
  %v1008 = vunpack.c.l.b16 %v969
  %v1009 = vunpack.c.l.b16 %v970
  %v1010 = vunpack.c.l.b16 %v971
  %v1011 = vunpack.c.l.b16 %v972
  %v1012 = vunpack.c.l.b16 %v973
  %v1013 = vunpack.c.l.b16 %v974
  %v1014 = vunpack.c.l.b16 %v975
  %v1015 = vunpack.c.l.b16 %v976
  %v1016 = vunpack.c.l.b16 %v977
  %v1017 = vunpack.c.l.b16 %v978
  %v1018 = vunpack.c.l.b16 %v979
  %v1019 = vunpack.c.l.b16 %v980
  %v1020 = vunpack.c.l.b16 %v981
  %v1021 = vpack.c.b16 %v1006, %v1005
  %v1022 = vpack.c.b16 %v1008, %v1007
  %v1023 = vpack.c.b16 %v1010, %v1009
  %v1024 = vpack.c.b16 %v1012, %v1011
  %v1025 = vpack.c.b16 %v1014, %v1013
  %v1026 = vpack.c.b16 %v1016, %v1015
  %v1027 = vpack.c.b16 %v1018, %v1017
  %v1028 = vpack.c.b16 %v1020, %v1019
  %1037 = vmatprep.subr.bf16.mxu0 0
  %1038 = vmatpush1.bf16.msra.mxu0 %v1021
  %1039 = vmatprep.subr.bf16.mxu0 0
  %1040 = vmatpush1.bf16.msra.mxu0 %v1022
  %1041 = vmatprep.subr.bf16.mxu0 0
  %1042 = vmatpush1.bf16.msra.mxu0 %v1023
  %1043 = vmatprep.subr.bf16.mxu0 0
  %1044 = vmatpush1.bf16.msra.mxu0 %v1024
  %1045 = vmatprep.subr.bf16.mxu0 0
  %1046 = vmatpush1.bf16.msra.mxu0 %v1025
  %1047 = vmatprep.subr.bf16.mxu0 0
  %1048 = vmatpush1.bf16.msra.mxu0 %v1026
  %1049 = vmatprep.subr.bf16.mxu0 0
  %1050 = vmatpush1.bf16.msra.mxu0 %v1027
  %1051 = vmatprep.subr.bf16.mxu0 0
  %1052 = vmatpush1.bf16.msra.mxu0 %v1028
  %1053 = vmatprep.subr.bf16.mxu0 0
  %1054 = vmatpush1.bf16.msra.mxu0 0
  %1055 = vmatprep.subr.bf16.mxu0 0
  %1056 = vmatpush1.bf16.msra.mxu0 0
  %1057 = vmatprep.subr.bf16.mxu0 0
  %1058 = vmatpush1.bf16.msra.mxu0 0
  %1059 = vmatprep.subr.bf16.mxu0 0
  %1060 = vmatpush1.bf16.msra.mxu0 0
  %1061 = vmatprep.subr.bf16.mxu0 0
  %1062 = vmatpush1.bf16.msra.mxu0 0
  %1063 = vmatprep.subr.bf16.mxu0 0
  %1064 = vmatpush1.bf16.msra.mxu0 0
  %1065 = vmatprep.subr.bf16.mxu0 0
  %1066 = vmatpush1.bf16.msra.mxu0 0
  %1067 = vmatprep.subr.bf16.mxu0 0
  %1068 = vmatpush1.bf16.msra.mxu0 0
  %1069 = vmatprep.mubr.bf16.mxu0 0
  %1070 = vmatmul.mubr.bf16.gmra.mrb[0].mxu0 %v953
  %v1071 = vpop.f32.mrb[0].mxu0
  %v1072 = vadd.f32 %v987, %v1071
  %v1073 = vpop.f32.mrb[0].mxu0
  %v1074 = vpop.f32.mrb[0].mxu0
  %v1075 = vadd.f32 %v987, %v1074
  %v1076 = vpop.f32.mrb[0].mxu0
  %1077 = vmatprep.mubr.bf16.mxu0 0
  %1078 = vmatmul.mubr.bf16.gmra.mrb[0].mxu0 %v954
  %v1079 = vpop.f32.mrb[0].mxu0
  %v1080 = vadd.f32 %v987, %v1079
  %v1081 = vpop.f32.mrb[0].mxu0
  %v1082 = vpop.f32.mrb[0].mxu0
  %v1083 = vadd.f32 %v987, %v1082
  %v1084 = vpop.f32.mrb[0].mxu0
  %1085 = vmatprep.mubr.bf16.mxu0 0
  %1086 = vmatmul.mubr.bf16.gmra.mrb[0].mxu0 %v955
  %v1087 = vpop.f32.mrb[0].mxu0
  %v1088 = vadd.f32 %v987, %v1087
  %v1089 = vpop.f32.mrb[0].mxu0
  %v1090 = vpop.f32.mrb[0].mxu0
  %v1091 = vadd.f32 %v987, %v1090
  %v1092 = vpop.f32.mrb[0].mxu0
  %1093 = vmatprep.mubr.bf16.mxu0 0
  %1094 = vmatmul.mubr.bf16.gmra.mrb[0].mxu0 %v956
  %v1095 = vpop.f32.mrb[0].mxu0
  %v1096 = vadd.f32 %v987, %v1095
  %v1097 = vpop.f32.mrb[0].mxu0
  %v1098 = vpop.f32.mrb[0].mxu0
  %v1099 = vadd.f32 %v987, %v1098
  %v1100 = vpop.f32.mrb[0].mxu0
  %1101 = vmatprep.mubr.bf16.mxu0 0
  %1102 = vmatmul.mubr.bf16.gmra.mrb[0].mxu0 %v957
  %v1103 = vpop.f32.mrb[0].mxu0
  %v1104 = vadd.f32 %v987, %v1103
  %v1105 = vpop.f32.mrb[0].mxu0
  %v1106 = vpop.f32.mrb[0].mxu0
  %v1107 = vadd.f32 %v987, %v1106
  %v1108 = vpop.f32.mrb[0].mxu0
  %1109 = vmatprep.mubr.bf16.mxu0 0
  %1110 = vmatmul.mubr.bf16.gmra.mrb[0].mxu0 %v958
  %v1111 = vpop.f32.mrb[0].mxu0
  %v1112 = vadd.f32 %v987, %v1111
  %v1113 = vpop.f32.mrb[0].mxu0
  %v1114 = vpop.f32.mrb[0].mxu0
  %v1115 = vadd.f32 %v987, %v1114
  %v1116 = vpop.f32.mrb[0].mxu0
  %1117 = vmatprep.mubr.bf16.mxu0 0
  %1118 = vmatmul.mubr.bf16.gmra.mrb[0].mxu0 %v959
  %v1119 = vpop.f32.mrb[0].mxu0
  %v1120 = vadd.f32 %v987, %v1119
  %v1121 = vpop.f32.mrb[0].mxu0
  %v1122 = vpop.f32.mrb[0].mxu0
  %v1123 = vadd.f32 %v987, %v1122
  %v1124 = vpop.f32.mrb[0].mxu0
  %1125 = vmatprep.mubr.bf16.mxu0 0
  %1126 = vmatmul.mubr.bf16.gmra.mrb[0].mxu0 %v960
  %v1127 = vpop.f32.mrb[0].mxu0
  %v1128 = vadd.f32 %v987, %v1127
  %v1129 = vpop.f32.mrb[0].mxu0
  %v1130 = vpop.f32.mrb[0].mxu0
  %v1131 = vadd.f32 %v987, %v1130
  %v1132 = vpop.f32.mrb[0].mxu0
  %1133 = vmatprep.mubr.bf16.mxu0 0
  %1134 = vmatmul.mubr.bf16.gmra.mrb[0].mxu0 %v961
  %v1135 = vpop.f32.mrb[0].mxu0
  %v1136 = vadd.f32 %v987, %v1135
  %v1137 = vpop.f32.mrb[0].mxu0
  %v1138 = vpop.f32.mrb[0].mxu0
  %v1139 = vadd.f32 %v987, %v1138
  %v1140 = vpop.f32.mrb[0].mxu0
  %1141 = vmatprep.mubr.bf16.mxu0 0
  %1142 = vmatmul.mubr.bf16.gmra.mrb[0].mxu0 %v962
  %v1143 = vpop.f32.mrb[0].mxu0
  %v1144 = vadd.f32 %v987, %v1143
  %v1145 = vpop.f32.mrb[0].mxu0
  %v1146 = vpop.f32.mrb[0].mxu0
  %v1147 = vadd.f32 %v987, %v1146
  %v1148 = vpop.f32.mrb[0].mxu0
  %1149 = vmatprep.mubr.bf16.mxu0 0
  %1150 = vmatmul.mubr.bf16.gmra.mrb[0].mxu0 %v963
  %v1151 = vpop.f32.mrb[0].mxu0
  %v1152 = vadd.f32 %v987, %v1151
  %v1153 = vpop.f32.mrb[0].mxu0
  %v1154 = vpop.f32.mrb[0].mxu0
  %v1155 = vadd.f32 %v987, %v1154
  %v1156 = vpop.f32.mrb[0].mxu0
  %1157 = vmatprep.mubr.bf16.mxu0 0
  %1158 = vmatmul.mubr.bf16.gmra.mrb[0].mxu0 %v964
  %v1159 = vpop.f32.mrb[0].mxu0
  %v1160 = vadd.f32 %v987, %v1159
  %v1161 = vpop.f32.mrb[0].mxu0
  %v1162 = vpop.f32.mrb[0].mxu0
  %v1163 = vadd.f32 %v987, %v1162
  %v1164 = vpop.f32.mrb[0].mxu0
  %1165 = vmatprep.mubr.bf16.mxu0 0
  %1166 = vmatmul.mubr.bf16.gmra.mrb[0].mxu0 %v965
  %v1167 = vpop.f32.mrb[0].mxu0
  %v1168 = vadd.f32 %v987, %v1167
  %v1169 = vpop.f32.mrb[0].mxu0
  %v1170 = vpop.f32.mrb[0].mxu0
  %v1171 = vpop.f32.mrb[0].mxu0
  %1172 = vdwg.mxu0
  %v1173 = vmax.f32 %v1072, 0.0
  %v1174 = vmax.f32 %v1075, 0.0
  %v1175 = vmax.f32 %v1080, 0.0
  %v1176 = vmax.f32 %v1083, 0.0
  %v1177 = vmax.f32 %v1088, 0.0
  %v1178 = vmax.f32 %v1091, 0.0
  %v1179 = vmax.f32 %v1096, 0.0
  %v1180 = vmax.f32 %v1099, 0.0
  %v1181 = vmax.f32 %v1104, 0.0
  %v1182 = vmax.f32 %v1107, 0.0
  %v1183 = vmax.f32 %v1112, 0.0
  %v1184 = vmax.f32 %v1115, 0.0
  %v1185 = vmax.f32 %v1120, 0.0
  %v1186 = vmax.f32 %v1123, 0.0
  %v1187 = vmax.f32 %v1128, 0.0
  %v1188 = vmax.f32 %v1131, 0.0
  %v1189 = vmax.f32 %v1136, 0.0
  %v1190 = vmax.f32 %v1139, 0.0
  %v1191 = vmax.f32 %v1144, 0.0
  %v1192 = vmax.f32 %v1147, 0.0
  %v1193 = vmax.f32 %v1152, 0.0
  %v1194 = vmax.f32 %v1155, 0.0
  %v1195 = vmax.f32 %v1160, 0.0
  %v1196 = vmax.f32 %v1163, 0.0
  %v1197 = vmax.f32 %v1168, 0.0
  %v1198 = vpack.c.bf16 %v1174, %v1173
  %v1199 = vpack.c.bf16 %v1176, %v1175
  %v1200 = vpack.c.bf16 %v1178, %v1177
  %v1201 = vpack.c.bf16 %v1180, %v1179
  %v1202 = vpack.c.bf16 %v1182, %v1181
  %v1203 = vpack.c.bf16 %v1184, %v1183
  %v1204 = vpack.c.bf16 %v1186, %v1185
  %v1205 = vpack.c.bf16 %v1188, %v1187
  %v1206 = vpack.c.bf16 %v1190, %v1189
  %v1207 = vpack.c.bf16 %v1192, %v1191
  %v1208 = vpack.c.bf16 %v1194, %v1193
  %v1209 = vpack.c.bf16 %v1196, %v1195
  %v1210 = vpack.c.bf16 %v1197, %v1197
  %v1211 = vld [vmem:[%s9] sm:$0xf]
  %v1212 = vld [vmem:[%s9 + $0x4] sm:$0xf]
  %v1213 = vld [vmem:[%s9 + $0x8] sm:$0xf]
  %v1214 = vld [vmem:[%s9 + $0xc] sm:$0xf]
  %v1215 = vld [vmem:[%s9 + $0x10] sm:$0xf]
  %v1216 = vld [vmem:[%s9 + $0x14] sm:$0xf]
  %v1217 = vld [vmem:[%s9 + $0x18] sm:$0xf]
  %v1218 = vld [vmem:[%s9 + $0x1c] sm:$0xf]
  %v1219 = vld [vmem:[%s10] sm:$0x1]
  %v1221 = vlaneseq
  %v1222 = vshrl.u32 %v1221, 7
  %v1223 = vsub.s32 0, %v1222
  %v1224 = vrot.slane %v1219, %v1223
  %v1234 = vunpack.c.l.b16 %v1211
  %v1235 = vunpack.c.l.b16 %v1212
  %v1236 = vunpack.c.l.b16 %v1213
  %v1237 = vunpack.c.l.b16 %v1214
  %v1238 = vunpack.c.l.b16 %v1215
  %v1239 = vunpack.c.l.b16 %v1216
  %v1240 = vunpack.c.l.b16 %v1217
  %v1241 = vunpack.c.l.b16 %v1218
  %v1242 = vpack.c.b16 %v1235, %v1234
  %v1243 = vpack.c.b16 %v1237, %v1236
  %v1244 = vpack.c.b16 %v1239, %v1238
  %v1245 = vpack.c.b16 %v1241, %v1240
  %vm1250 = vcmask 523264
  %v1252 = vsel %vm1250, %v1198, 0
  %v1255 = vsel %vm1250, %v1199, 0
  %v1258 = vsel %vm1250, %v1200, 0
  %v1261 = vsel %vm1250, %v1201, 0
  %v1264 = vsel %vm1250, %v1202, 0
  %v1267 = vsel %vm1250, %v1203, 0
  %v1270 = vsel %vm1250, %v1204, 0
  %v1273 = vsel %vm1250, %v1205, 0
  %v1276 = vsel %vm1250, %v1206, 0
  %v1279 = vsel %vm1250, %v1207, 0
  %v1282 = vsel %vm1250, %v1208, 0
  %v1285 = vsel %vm1250, %v1209, 0
  %v1288 = vsel %vm1250, %v1210, 0
  %1290 = vmatprep.subr.bf16.mxu0 0
  %1291 = vmatpush1.bf16.msra.mxu0 %v1242
  %1292 = vmatprep.subr.bf16.mxu0 0
  %1293 = vmatpush1.bf16.msra.mxu0 %v1243
  %1294 = vmatprep.subr.bf16.mxu0 0
  %1295 = vmatpush1.bf16.msra.mxu0 %v1244
  %1296 = vmatprep.subr.bf16.mxu0 0
  %1297 = vmatpush1.bf16.msra.mxu0 %v1245
  %1298 = vmatprep.subr.bf16.mxu0 0
  %1299 = vmatpush1.bf16.msra.mxu0 0
  %1300 = vmatprep.subr.bf16.mxu0 0
  %1301 = vmatpush1.bf16.msra.mxu0 0
  %1302 = vmatprep.subr.bf16.mxu0 0
  %1303 = vmatpush1.bf16.msra.mxu0 0
  %1304 = vmatprep.subr.bf16.mxu0 0
  %1305 = vmatpush1.bf16.msra.mxu0 0
  %1306 = vmatprep.subr.bf16.mxu0 0
  %1307 = vmatpush1.bf16.msra.mxu0 0
  %1308 = vmatprep.subr.bf16.mxu0 0
  %1309 = vmatpush1.bf16.msra.mxu0 0
  %1310 = vmatprep.subr.bf16.mxu0 0
  %1311 = vmatpush1.bf16.msra.mxu0 0
  %1312 = vmatprep.subr.bf16.mxu0 0
  %1313 = vmatpush1.bf16.msra.mxu0 0
  %1314 = vmatprep.subr.bf16.mxu0 0
  %1315 = vmatpush1.bf16.msra.mxu0 0
  %1316 = vmatprep.subr.bf16.mxu0 0
  %1317 = vmatpush1.bf16.msra.mxu0 0
  %1318 = vmatprep.subr.bf16.mxu0 0
  %1319 = vmatpush1.bf16.msra.mxu0 0
  %1320 = vmatprep.subr.bf16.mxu0 0
  %1321 = vmatpush1.bf16.msra.mxu0 0
  %1322 = vmatprep.mubr.bf16.mxu0 0
  %1323 = vmatmul.mubr.bf16.gmra.mrb[0].mxu0 %v1252
  %v1324 = vpop.f32.mrb[0].mxu0
  %v1325 = vadd.f32 %v1224, %v1324
  %v1326 = vpop.f32.mrb[0].mxu0
  %v1327 = vpop.f32.mrb[0].mxu0
  %v1328 = vadd.f32 %v1224, %v1327
  %v1329 = vpop.f32.mrb[0].mxu0
  %1330 = vmatprep.mubr.bf16.mxu0 0
  %1331 = vmatmul.mubr.bf16.gmra.mrb[0].mxu0 %v1255
  %v1332 = vpop.f32.mrb[0].mxu0
  %v1333 = vadd.f32 %v1224, %v1332
  %v1334 = vpop.f32.mrb[0].mxu0
  %v1335 = vpop.f32.mrb[0].mxu0
  %v1336 = vadd.f32 %v1224, %v1335
  %v1337 = vpop.f32.mrb[0].mxu0
  %1338 = vmatprep.mubr.bf16.mxu0 0
  %1339 = vmatmul.mubr.bf16.gmra.mrb[0].mxu0 %v1258
  %v1340 = vpop.f32.mrb[0].mxu0
  %v1341 = vadd.f32 %v1224, %v1340
  %v1342 = vpop.f32.mrb[0].mxu0
  %v1343 = vpop.f32.mrb[0].mxu0
  %v1344 = vadd.f32 %v1224, %v1343
  %v1345 = vpop.f32.mrb[0].mxu0
  %1346 = vmatprep.mubr.bf16.mxu0 0
  %1347 = vmatmul.mubr.bf16.gmra.mrb[0].mxu0 %v1261
  %v1348 = vpop.f32.mrb[0].mxu0
  %v1349 = vadd.f32 %v1224, %v1348
  %v1350 = vpop.f32.mrb[0].mxu0
  %v1351 = vpop.f32.mrb[0].mxu0
  %v1352 = vadd.f32 %v1224, %v1351
  %v1353 = vpop.f32.mrb[0].mxu0
  %1354 = vmatprep.mubr.bf16.mxu0 0
  %1355 = vmatmul.mubr.bf16.gmra.mrb[0].mxu0 %v1264
  %v1356 = vpop.f32.mrb[0].mxu0
  %v1357 = vadd.f32 %v1224, %v1356
  %v1358 = vpop.f32.mrb[0].mxu0
  %v1359 = vpop.f32.mrb[0].mxu0
  %v1360 = vadd.f32 %v1224, %v1359
  %v1361 = vpop.f32.mrb[0].mxu0
  %1362 = vmatprep.mubr.bf16.mxu0 0
  %1363 = vmatmul.mubr.bf16.gmra.mrb[0].mxu0 %v1267
  %v1364 = vpop.f32.mrb[0].mxu0
  %v1365 = vadd.f32 %v1224, %v1364
  %v1366 = vpop.f32.mrb[0].mxu0
  %v1367 = vpop.f32.mrb[0].mxu0
  %v1368 = vadd.f32 %v1224, %v1367
  %v1369 = vpop.f32.mrb[0].mxu0
  %1370 = vmatprep.mubr.bf16.mxu0 0
  %1371 = vmatmul.mubr.bf16.gmra.mrb[0].mxu0 %v1270
  %v1372 = vpop.f32.mrb[0].mxu0
  %v1373 = vadd.f32 %v1224, %v1372
  %v1374 = vpop.f32.mrb[0].mxu0
  %v1375 = vpop.f32.mrb[0].mxu0
  %v1376 = vadd.f32 %v1224, %v1375
  %v1377 = vpop.f32.mrb[0].mxu0
  %1378 = vmatprep.mubr.bf16.mxu0 0
  %1379 = vmatmul.mubr.bf16.gmra.mrb[0].mxu0 %v1273
  %v1380 = vpop.f32.mrb[0].mxu0
  %v1381 = vadd.f32 %v1224, %v1380
  %v1382 = vpop.f32.mrb[0].mxu0
  %v1383 = vpop.f32.mrb[0].mxu0
  %v1384 = vadd.f32 %v1224, %v1383
  %v1385 = vpop.f32.mrb[0].mxu0
  %1386 = vmatprep.mubr.bf16.mxu0 0
  %1387 = vmatmul.mubr.bf16.gmra.mrb[0].mxu0 %v1276
  %v1388 = vpop.f32.mrb[0].mxu0
  %v1389 = vadd.f32 %v1224, %v1388
  %v1390 = vpop.f32.mrb[0].mxu0
  %v1391 = vpop.f32.mrb[0].mxu0
  %v1392 = vadd.f32 %v1224, %v1391
  %v1393 = vpop.f32.mrb[0].mxu0
  %1394 = vmatprep.mubr.bf16.mxu0 0
  %1395 = vmatmul.mubr.bf16.gmra.mrb[0].mxu0 %v1279
  %v1396 = vpop.f32.mrb[0].mxu0
  %v1397 = vadd.f32 %v1224, %v1396
  %v1398 = vpop.f32.mrb[0].mxu0
  %v1399 = vpop.f32.mrb[0].mxu0
  %v1400 = vadd.f32 %v1224, %v1399
  %v1401 = vpop.f32.mrb[0].mxu0
  %1402 = vmatprep.mubr.bf16.mxu0 0
  %1403 = vmatmul.mubr.bf16.gmra.mrb[0].mxu0 %v1282
  %v1404 = vpop.f32.mrb[0].mxu0
  %v1405 = vadd.f32 %v1224, %v1404
  %v1406 = vpop.f32.mrb[0].mxu0
  %v1407 = vpop.f32.mrb[0].mxu0
  %v1408 = vadd.f32 %v1224, %v1407
  %v1409 = vpop.f32.mrb[0].mxu0
  %1410 = vmatprep.mubr.bf16.mxu0 0
  %1411 = vmatmul.mubr.bf16.gmra.mrb[0].mxu0 %v1285
  %v1412 = vpop.f32.mrb[0].mxu0
  %v1413 = vadd.f32 %v1224, %v1412
  %v1414 = vpop.f32.mrb[0].mxu0
  %v1415 = vpop.f32.mrb[0].mxu0
  %v1416 = vadd.f32 %v1224, %v1415
  %v1417 = vpop.f32.mrb[0].mxu0
  %1418 = vmatprep.mubr.bf16.mxu0 0
  %1419 = vmatmul.mubr.bf16.gmra.mrb[0].mxu0 %v1288
  %v1420 = vpop.f32.mrb[0].mxu0
  %v1421 = vadd.f32 %v1224, %v1420
  %v1422 = vpop.f32.mrb[0].mxu0
  %v1423 = vpop.f32.mrb[0].mxu0
  %v1424 = vpop.f32.mrb[0].mxu0
  %1425 = vdwg.mxu0
  %vm1426 = vcmask 31744
  %1427 = vst.msk [vmem:[%s11] sm:$0xff] %vm1426, %v1325
  %1428 = vst.msk [vmem:[%s11 + $0x8] sm:$0xff] %vm1426, %v1328
  %1429 = vst.msk [vmem:[%s11 + $0x10] sm:$0xff] %vm1426, %v1333
  %1430 = vst.msk [vmem:[%s11 + $0x18] sm:$0xff] %vm1426, %v1336
  %1431 = vst.msk [vmem:[%s11 + $0x20] sm:$0xff] %vm1426, %v1341
  %1432 = vst.msk [vmem:[%s11 + $0x28] sm:$0xff] %vm1426, %v1344
  %1433 = vst.msk [vmem:[%s11 + $0x30] sm:$0xff] %vm1426, %v1349
  %1434 = vst.msk [vmem:[%s11 + $0x38] sm:$0xff] %vm1426, %v1352
  %1435 = vst.msk [vmem:[%s11 + $0x40] sm:$0xff] %vm1426, %v1357
  %1436 = vst.msk [vmem:[%s11 + $0x48] sm:$0xff] %vm1426, %v1360
  %1437 = vst.msk [vmem:[%s11 + $0x50] sm:$0xff] %vm1426, %v1365
  %1438 = vst.msk [vmem:[%s11 + $0x58] sm:$0xff] %vm1426, %v1368
  %1439 = vst.msk [vmem:[%s11 + $0x60] sm:$0xff] %vm1426, %v1373
  %1440 = vst.msk [vmem:[%s11 + $0x68] sm:$0xff] %vm1426, %v1376
  %1441 = vst.msk [vmem:[%s11 + $0x70] sm:$0xff] %vm1426, %v1381
  %1442 = vst.msk [vmem:[%s11 + $0x78] sm:$0xff] %vm1426, %v1384
  %1443 = vst.msk [vmem:[%s11 + $0x80] sm:$0xff] %vm1426, %v1389
  %1444 = vst.msk [vmem:[%s11 + $0x88] sm:$0xff] %vm1426, %v1392
  %1445 = vst.msk [vmem:[%s11 + $0x90] sm:$0xff] %vm1426, %v1397
  %1446 = vst.msk [vmem:[%s11 + $0x98] sm:$0xff] %vm1426, %v1400
  %1447 = vst.msk [vmem:[%s11 + $0xa0] sm:$0xff] %vm1426, %v1405
  %1448 = vst.msk [vmem:[%s11 + $0xa8] sm:$0xff] %vm1426, %v1408
  %1449 = vst.msk [vmem:[%s11 + $0xb0] sm:$0xff] %vm1426, %v1413
  %1450 = vst.msk [vmem:[%s11 + $0xb8] sm:$0xff] %vm1426, %v1416
  %1451 = vst.msk [vmem:[%s11 + $0xc0] sm:$0xff] %vm1426, %v1421
  %v1452 = vpack.c.bf16 %v643, %v642
  %v1453 = vpack.c.bf16 %v645, %v644
  %v1454 = vpack.c.bf16 %v647, %v646
  %v1455 = vpack.c.bf16 %v649, %v648
  %v1456 = vpack.c.bf16 %v651, %v650
  %v1457 = vpack.c.bf16 %v653, %v652
  %v1458 = vpack.c.bf16 %v655, %v654
  %v1459 = vpack.c.bf16 %v657, %v656
  %v1460 = vpack.c.bf16 %v659, %v658
  %v1461 = vpack.c.bf16 %v661, %v660
  %v1462 = vpack.c.bf16 %v663, %v662
  %v1463 = vpack.c.bf16 %v665, %v664
  %v1464 = vpack.c.bf16 %v666, %v666
  %v1478 = vunpack.c.l.b16 %v1452
  %v1479 = vunpack.c.h.b16 %v1452
  %v1480 = vunpack.c.l.b16 %v1453
  %v1481 = vunpack.c.h.b16 %v1453
  %v1482 = vunpack.c.l.b16 %v1454
  %v1483 = vunpack.c.h.b16 %v1454
  %v1484 = vunpack.c.l.b16 %v1455
  %v1485 = vunpack.c.h.b16 %v1455
  %v1486 = vunpack.c.l.b16 %v1456
  %v1487 = vunpack.c.h.b16 %v1456
  %v1488 = vunpack.c.l.b16 %v1457
  %v1489 = vunpack.c.h.b16 %v1457
  %v1490 = vunpack.c.l.b16 %v1458
  %v1491 = vunpack.c.h.b16 %v1458
  %v1492 = vunpack.c.l.b16 %v1459
  %v1493 = vunpack.c.h.b16 %v1459
  %v1494 = vunpack.c.l.b16 %v1460
  %v1495 = vunpack.c.h.b16 %v1460
  %v1496 = vunpack.c.l.b16 %v1461
  %v1497 = vunpack.c.h.b16 %v1461
  %v1498 = vunpack.c.l.b16 %v1462
  %v1499 = vunpack.c.h.b16 %v1462
  %v1500 = vunpack.c.l.b16 %v1463
  %v1501 = vunpack.c.h.b16 %v1463
  %v1502 = vunpack.c.l.b16 %v1464
  %v1503 = vpack.c.b16 %v1478, %v1478
  %v1504 = vpack.c.b16 %v1479, %v1479
  %v1505 = vpack.c.b16 %v1480, %v1480
  %v1506 = vpack.c.b16 %v1481, %v1481
  %v1507 = vpack.c.b16 %v1482, %v1482
  %v1508 = vpack.c.b16 %v1483, %v1483
  %v1509 = vpack.c.b16 %v1484, %v1484
  %v1510 = vpack.c.b16 %v1485, %v1485
  %v1511 = vpack.c.b16 %v1486, %v1486
  %v1512 = vpack.c.b16 %v1487, %v1487
  %v1513 = vpack.c.b16 %v1488, %v1488
  %v1514 = vpack.c.b16 %v1489, %v1489
  %v1515 = vpack.c.b16 %v1490, %v1490
  %v1516 = vpack.c.b16 %v1491, %v1491
  %v1517 = vpack.c.b16 %v1492, %v1492
  %v1518 = vpack.c.b16 %v1493, %v1493
  %v1519 = vpack.c.b16 %v1494, %v1494
  %v1520 = vpack.c.b16 %v1495, %v1495
  %v1521 = vpack.c.b16 %v1496, %v1496
  %v1522 = vpack.c.b16 %v1497, %v1497
  %v1523 = vpack.c.b16 %v1498, %v1498
  %v1524 = vpack.c.b16 %v1499, %v1499
  %v1525 = vpack.c.b16 %v1500, %v1500
  %v1526 = vpack.c.b16 %v1501, %v1501
  %v1527 = vpack.c.b16 %v1502, %v1502
  %vm1553 = vcmask 257024
  %1554 = vst.msk [vmem:[%s12] sm:$0xf] %vm1553, %v1503
  %1555 = vst.msk [vmem:[%s12 + $0x4] sm:$0xf] %vm1553, %v1504
  %1556 = vst.msk [vmem:[%s12 + $0x8] sm:$0xf] %vm1553, %v1505
  %1557 = vst.msk [vmem:[%s12 + $0xc] sm:$0xf] %vm1553, %v1506
  %1558 = vst.msk [vmem:[%s12 + $0x10] sm:$0xf] %vm1553, %v1507
  %1559 = vst.msk [vmem:[%s12 + $0x14] sm:$0xf] %vm1553, %v1508
  %1560 = vst.msk [vmem:[%s12 + $0x18] sm:$0xf] %vm1553, %v1509
  %1561 = vst.msk [vmem:[%s12 + $0x1c] sm:$0xf] %vm1553, %v1510
  %1562 = vst.msk [vmem:[%s12 + $0x20] sm:$0xf] %vm1553, %v1511
  %1563 = vst.msk [vmem:[%s12 + $0x24] sm:$0xf] %vm1553, %v1512
  %1564 = vst.msk [vmem:[%s12 + $0x28] sm:$0xf] %vm1553, %v1513
  %1565 = vst.msk [vmem:[%s12 + $0x2c] sm:$0xf] %vm1553, %v1514
  %1566 = vst.msk [vmem:[%s12 + $0x30] sm:$0xf] %vm1553, %v1515
  %1567 = vst.msk [vmem:[%s12 + $0x34] sm:$0xf] %vm1553, %v1516
  %1568 = vst.msk [vmem:[%s12 + $0x38] sm:$0xf] %vm1553, %v1517
  %1569 = vst.msk [vmem:[%s12 + $0x3c] sm:$0xf] %vm1553, %v1518
  %1570 = vst.msk [vmem:[%s12 + $0x40] sm:$0xf] %vm1553, %v1519
  %1571 = vst.msk [vmem:[%s12 + $0x44] sm:$0xf] %vm1553, %v1520
  %1572 = vst.msk [vmem:[%s12 + $0x48] sm:$0xf] %vm1553, %v1521
  %1573 = vst.msk [vmem:[%s12 + $0x4c] sm:$0xf] %vm1553, %v1522
  %1574 = vst.msk [vmem:[%s12 + $0x50] sm:$0xf] %vm1553, %v1523
  %1575 = vst.msk [vmem:[%s12 + $0x54] sm:$0xf] %vm1553, %v1524
  %1576 = vst.msk [vmem:[%s12 + $0x58] sm:$0xf] %vm1553, %v1525
  %1577 = vst.msk [vmem:[%s12 + $0x5c] sm:$0xf] %vm1553, %v1526
  %1578 = vst.msk [vmem:[%s12 + $0x60] sm:$0xf] %vm1553, %v1527
  %v1592 = vunpack.c.l.b16 %v717
  %v1593 = vunpack.c.h.b16 %v717
  %v1594 = vunpack.c.l.b16 %v718
  %v1595 = vunpack.c.h.b16 %v718
  %v1596 = vunpack.c.l.b16 %v719
  %v1597 = vunpack.c.h.b16 %v719
  %v1598 = vunpack.c.l.b16 %v720
  %v1599 = vunpack.c.h.b16 %v720
  %v1600 = vunpack.c.l.b16 %v721
  %v1601 = vunpack.c.h.b16 %v721
  %v1602 = vunpack.c.l.b16 %v722
  %v1603 = vunpack.c.h.b16 %v722
  %v1604 = vunpack.c.l.b16 %v723
  %v1605 = vunpack.c.h.b16 %v723
  %v1606 = vunpack.c.l.b16 %v724
  %v1607 = vunpack.c.h.b16 %v724
  %v1608 = vunpack.c.l.b16 %v725
  %v1609 = vunpack.c.h.b16 %v725
  %v1610 = vunpack.c.l.b16 %v726
  %v1611 = vunpack.c.h.b16 %v726
  %v1612 = vunpack.c.l.b16 %v727
  %v1613 = vunpack.c.h.b16 %v727
  %v1614 = vunpack.c.l.b16 %v728
  %v1615 = vunpack.c.h.b16 %v728
  %v1616 = vunpack.c.l.b16 %v729
  %v1617 = vpack.c.b16 %v1592, %v1592
  %v1618 = vpack.c.b16 %v1593, %v1593
  %v1619 = vpack.c.b16 %v1594, %v1594
  %v1620 = vpack.c.b16 %v1595, %v1595
  %v1621 = vpack.c.b16 %v1596, %v1596
  %v1622 = vpack.c.b16 %v1597, %v1597
  %v1623 = vpack.c.b16 %v1598, %v1598
  %v1624 = vpack.c.b16 %v1599, %v1599
  %v1625 = vpack.c.b16 %v1600, %v1600
  %v1626 = vpack.c.b16 %v1601, %v1601
  %v1627 = vpack.c.b16 %v1602, %v1602
  %v1628 = vpack.c.b16 %v1603, %v1603
  %v1629 = vpack.c.b16 %v1604, %v1604
  %v1630 = vpack.c.b16 %v1605, %v1605
  %v1631 = vpack.c.b16 %v1606, %v1606
  %v1632 = vpack.c.b16 %v1607, %v1607
  %v1633 = vpack.c.b16 %v1608, %v1608
  %v1634 = vpack.c.b16 %v1609, %v1609
  %v1635 = vpack.c.b16 %v1610, %v1610
  %v1636 = vpack.c.b16 %v1611, %v1611
  %v1637 = vpack.c.b16 %v1612, %v1612
  %v1638 = vpack.c.b16 %v1613, %v1613
  %v1639 = vpack.c.b16 %v1614, %v1614
  %v1640 = vpack.c.b16 %v1615, %v1615
  %v1641 = vpack.c.b16 %v1616, %v1616
  %1667 = vst.msk [vmem:[%s13] sm:$0xf] %vm1553, %v1617
  %1668 = vst.msk [vmem:[%s13 + $0x4] sm:$0xf] %vm1553, %v1618
  %1669 = vst.msk [vmem:[%s13 + $0x8] sm:$0xf] %vm1553, %v1619
  %1670 = vst.msk [vmem:[%s13 + $0xc] sm:$0xf] %vm1553, %v1620
  %1671 = vst.msk [vmem:[%s13 + $0x10] sm:$0xf] %vm1553, %v1621
  %1672 = vst.msk [vmem:[%s13 + $0x14] sm:$0xf] %vm1553, %v1622
  %1673 = vst.msk [vmem:[%s13 + $0x18] sm:$0xf] %vm1553, %v1623
  %1674 = vst.msk [vmem:[%s13 + $0x1c] sm:$0xf] %vm1553, %v1624
  %1675 = vst.msk [vmem:[%s13 + $0x20] sm:$0xf] %vm1553, %v1625
  %1676 = vst.msk [vmem:[%s13 + $0x24] sm:$0xf] %vm1553, %v1626
  %1677 = vst.msk [vmem:[%s13 + $0x28] sm:$0xf] %vm1553, %v1627
  %1678 = vst.msk [vmem:[%s13 + $0x2c] sm:$0xf] %vm1553, %v1628
  %1679 = vst.msk [vmem:[%s13 + $0x30] sm:$0xf] %vm1553, %v1629
  %1680 = vst.msk [vmem:[%s13 + $0x34] sm:$0xf] %vm1553, %v1630
  %1681 = vst.msk [vmem:[%s13 + $0x38] sm:$0xf] %vm1553, %v1631
  %1682 = vst.msk [vmem:[%s13 + $0x3c] sm:$0xf] %vm1553, %v1632
  %1683 = vst.msk [vmem:[%s13 + $0x40] sm:$0xf] %vm1553, %v1633
  %1684 = vst.msk [vmem:[%s13 + $0x44] sm:$0xf] %vm1553, %v1634
  %1685 = vst.msk [vmem:[%s13 + $0x48] sm:$0xf] %vm1553, %v1635
  %1686 = vst.msk [vmem:[%s13 + $0x4c] sm:$0xf] %vm1553, %v1636
  %1687 = vst.msk [vmem:[%s13 + $0x50] sm:$0xf] %vm1553, %v1637
  %1688 = vst.msk [vmem:[%s13 + $0x54] sm:$0xf] %vm1553, %v1638
  %1689 = vst.msk [vmem:[%s13 + $0x58] sm:$0xf] %vm1553, %v1639
  %1690 = vst.msk [vmem:[%s13 + $0x5c] sm:$0xf] %vm1553, %v1640
  %1691 = vst.msk [vmem:[%s13 + $0x60] sm:$0xf] %vm1553, %v1641
  %v1705 = vunpack.c.l.b16 %v1198
  %v1706 = vunpack.c.h.b16 %v1198
  %v1707 = vunpack.c.l.b16 %v1199
  %v1708 = vunpack.c.h.b16 %v1199
  %v1709 = vunpack.c.l.b16 %v1200
  %v1710 = vunpack.c.h.b16 %v1200
  %v1711 = vunpack.c.l.b16 %v1201
  %v1712 = vunpack.c.h.b16 %v1201
  %v1713 = vunpack.c.l.b16 %v1202
  %v1714 = vunpack.c.h.b16 %v1202
  %v1715 = vunpack.c.l.b16 %v1203
  %v1716 = vunpack.c.h.b16 %v1203
  %v1717 = vunpack.c.l.b16 %v1204
  %v1718 = vunpack.c.h.b16 %v1204
  %v1719 = vunpack.c.l.b16 %v1205
  %v1720 = vunpack.c.h.b16 %v1205
  %v1721 = vunpack.c.l.b16 %v1206
  %v1722 = vunpack.c.h.b16 %v1206
  %v1723 = vunpack.c.l.b16 %v1207
  %v1724 = vunpack.c.h.b16 %v1207
  %v1725 = vunpack.c.l.b16 %v1208
  %v1726 = vunpack.c.h.b16 %v1208
  %v1727 = vunpack.c.l.b16 %v1209
  %v1728 = vunpack.c.h.b16 %v1209
  %v1729 = vunpack.c.l.b16 %v1210
  %v1730 = vpack.c.b16 %v1705, %v1705
  %v1731 = vpack.c.b16 %v1706, %v1706
  %v1732 = vpack.c.b16 %v1707, %v1707
  %v1733 = vpack.c.b16 %v1708, %v1708
  %v1734 = vpack.c.b16 %v1709, %v1709
  %v1735 = vpack.c.b16 %v1710, %v1710
  %v1736 = vpack.c.b16 %v1711, %v1711
  %v1737 = vpack.c.b16 %v1712, %v1712
  %v1738 = vpack.c.b16 %v1713, %v1713
  %v1739 = vpack.c.b16 %v1714, %v1714
  %v1740 = vpack.c.b16 %v1715, %v1715
  %v1741 = vpack.c.b16 %v1716, %v1716
  %v1742 = vpack.c.b16 %v1717, %v1717
  %v1743 = vpack.c.b16 %v1718, %v1718
  %v1744 = vpack.c.b16 %v1719, %v1719
  %v1745 = vpack.c.b16 %v1720, %v1720
  %v1746 = vpack.c.b16 %v1721, %v1721
  %v1747 = vpack.c.b16 %v1722, %v1722
  %v1748 = vpack.c.b16 %v1723, %v1723
  %v1749 = vpack.c.b16 %v1724, %v1724
  %v1750 = vpack.c.b16 %v1725, %v1725
  %v1751 = vpack.c.b16 %v1726, %v1726
  %v1752 = vpack.c.b16 %v1727, %v1727
  %v1753 = vpack.c.b16 %v1728, %v1728
  %v1754 = vpack.c.b16 %v1729, %v1729
  %vm1780 = vcmask 519168
  %1781 = vst.msk [vmem:[%s14] sm:$0xf] %vm1780, %v1730
  %1782 = vst.msk [vmem:[%s14 + $0x4] sm:$0xf] %vm1780, %v1731
  %1783 = vst.msk [vmem:[%s14 + $0x8] sm:$0xf] %vm1780, %v1732
  %1784 = vst.msk [vmem:[%s14 + $0xc] sm:$0xf] %vm1780, %v1733
  %1785 = vst.msk [vmem:[%s14 + $0x10] sm:$0xf] %vm1780, %v1734
  %1786 = vst.msk [vmem:[%s14 + $0x14] sm:$0xf] %vm1780, %v1735
  %1787 = vst.msk [vmem:[%s14 + $0x18] sm:$0xf] %vm1780, %v1736
  %1788 = vst.msk [vmem:[%s14 + $0x1c] sm:$0xf] %vm1780, %v1737
  %1789 = vst.msk [vmem:[%s14 + $0x20] sm:$0xf] %vm1780, %v1738
  %1790 = vst.msk [vmem:[%s14 + $0x24] sm:$0xf] %vm1780, %v1739
  %1791 = vst.msk [vmem:[%s14 + $0x28] sm:$0xf] %vm1780, %v1740
  %1792 = vst.msk [vmem:[%s14 + $0x2c] sm:$0xf] %vm1780, %v1741
  %1793 = vst.msk [vmem:[%s14 + $0x30] sm:$0xf] %vm1780, %v1742
  %1794 = vst.msk [vmem:[%s14 + $0x34] sm:$0xf] %vm1780, %v1743
  %1795 = vst.msk [vmem:[%s14 + $0x38] sm:$0xf] %vm1780, %v1744
  %1796 = vst.msk [vmem:[%s14 + $0x3c] sm:$0xf] %vm1780, %v1745
  %1797 = vst.msk [vmem:[%s14 + $0x40] sm:$0xf] %vm1780, %v1746
  %1798 = vst.msk [vmem:[%s14 + $0x44] sm:$0xf] %vm1780, %v1747
  %1799 = vst.msk [vmem:[%s14 + $0x48] sm:$0xf] %vm1780, %v1748
  %1800 = vst.msk [vmem:[%s14 + $0x4c] sm:$0xf] %vm1780, %v1749
  %1801 = vst.msk [vmem:[%s14 + $0x50] sm:$0xf] %vm1780, %v1750
  %1802 = vst.msk [vmem:[%s14 + $0x54] sm:$0xf] %vm1780, %v1751
  %1803 = vst.msk [vmem:[%s14 + $0x58] sm:$0xf] %vm1780, %v1752
  %1804 = vst.msk [vmem:[%s14 + $0x5c] sm:$0xf] %vm1780, %v1753
  %1805 = vst.msk [vmem:[%s14 + $0x60] sm:$0xf] %vm1780, %v1754
  // Predicated region
  $region46: #{tpu_custom_call.1} parent=0 // pred_check
    _
  $region47: #{tpu_custom_call.1} parent=0 // pred_check_branch
    %1807 = sbr.rel (0) target = $region49
  $region48: #{tpu_custom_call.1} parent=0 // pred_region
    _
  $region49: #{tpu_custom_call.1} parent=0 // pred_fallthru
    _
  // Predicated region
  $region50: #{tpu_custom_call.1} parent=0 // pred_check
    _
  $region51: #{tpu_custom_call.1} parent=0 // pred_check_branch
    %1809 = sbr.rel (0) target = $region53
  $region52: #{tpu_custom_call.1} parent=0 // pred_region
    _
  $region53: #{tpu_custom_call.1} parent=0 // pred_fallthru
    _
  // Predicated region
  $region54: #{tpu_custom_call.1} parent=0 // pred_check
    _
  $region55: #{tpu_custom_call.1} parent=0 // pred_check_branch
    %1811 = sbr.rel (0) target = $region57
  $region56: #{tpu_custom_call.1} parent=0 // pred_region
    _
  $region57: #{tpu_custom_call.1} parent=0 // pred_fallthru
    _
  // Predicated region
  $region58: #{tpu_custom_call.1} parent=0 // pred_check
    _
  $region59: #{tpu_custom_call.1} parent=0 // pred_check_branch
    %1813 = sbr.rel (0) target = $region61
  $region60: #{tpu_custom_call.1} parent=0 // pred_region
    _
  $region61: #{tpu_custom_call.1} parent=0 // pred_fallthru
    _
  // Predicated region
  $region62: #{tpu_custom_call.1} parent=0 // pred_check
    _
  $region63: #{tpu_custom_call.1} parent=0 // pred_check_branch
    %1815 = sbr.rel (0) target = $region65
  $region64: #{tpu_custom_call.1} parent=0 // pred_region
    _
  $region65: #{tpu_custom_call.1} parent=0 // pred_fallthru
    _
  // Predicated region
  $region66: #{tpu_custom_call.1} parent=0 // pred_check
    _
  $region67: #{tpu_custom_call.1} parent=0 // pred_check_branch
    %1817 = sbr.rel (0) target = $region69
  $region68: #{tpu_custom_call.1} parent=0 // pred_region
    _
  $region69: #{tpu_custom_call.1} parent=0 // pred_fallthru
    _
  // Predicated region
  $region70: #{tpu_custom_call.1} parent=0 // pred_check
    _
  $region71: #{tpu_custom_call.1} parent=0 // pred_check_branch
    %1819 = sbr.rel (0) target = $region73
  $region72: #{tpu_custom_call.1} parent=0 // pred_region
    _
  $region73: #{tpu_custom_call.1} parent=0 // pred_fallthru
    _
  // Predicated region
  $region74: #{tpu_custom_call.1} parent=0 // pred_check
    _
  $region75: #{tpu_custom_call.1} parent=0 // pred_check_branch
    %1821 = sbr.rel (0) target = $region77
  $region76: #{tpu_custom_call.1} parent=0 // pred_region
    _
  $region77: #{tpu_custom_call.1} parent=0 // pred_fallthru
    _

</llo_original>
